<compile_context>
chip_gen: v5e
topology: v5e:2x2
jax: 0.10.0
libtpu: 0.0.40
codegen_flags: <defaults>
</compile_context>

<pallas_src>
import functools
import math

import jax
import jax.numpy as jnp
from jax.experimental import pallas as pl
from jax.experimental.pallas import tpu as pltpu

NEG_INF = -1e30  # large finite negative (avoids NaN from exp(-inf - -inf))


def _flash_attn_kernel(*refs, scale, causal, has_kpm, tq, tk, H):
    if has_kpm:
        (lens_ref, q_ref, k_ref, v_ref, mask_ref,
         o_ref, qs_sc, m_sc, l_sc, acc_sc) = refs
    else:
        q_ref, k_ref, v_ref, o_ref, qs_sc, m_sc, l_sc, acc_sc = refs
        lens_ref = None
        mask_ref = None

    bh = pl.program_id(0)
    qi = pl.program_id(1)
    ki = pl.program_id(2)

    # Init at the start of each kv sweep (reduction axis = last grid axis).
    @pl.when(ki == 0)
    def _():
        # Fold the softmax scale into q once per q-tile (tq*D elements) —
        # much cheaper than scaling every (tq,tk) score tile.
        qs_sc[...] = (q_ref[0].astype(jnp.float32) * scale).astype(qs_sc.dtype)
        m_sc[...] = jnp.full_like(m_sc, NEG_INF)
        l_sc[...] = jnp.zeros_like(l_sc)
        acc_sc[...] = jnp.zeros_like(acc_sc)

    def compute(apply_causal):
        # scores = (scale*q) @ k^T -> (tq, tk); bf16 operands, f32 MXU accum.
        s = jax.lax.dot_general(qs_sc[...], k_ref[0], (((1,), (1,)), ((), ())),
                                preferred_element_type=jnp.float32)

        # Combined (causal & key-padding) mask -> single select on (tq, tk).
        keep = None
        if apply_causal:
            q_pos = qi * tq + jax.lax.broadcasted_iota(jnp.int32, (tq, 1), 0)
            k_pos = ki * tk + jax.lax.broadcasted_iota(jnp.int32, (1, tk), 1)
            keep = q_pos >= k_pos                       # (tq, tk) via bcast cmp
        if has_kpm:
            kpm = (mask_ref[0, 0, :] > 0)[None, :]      # (1, tk), 1 = keep
            keep = kpm if keep is None else jnp.logical_and(keep, kpm)
        if keep is not None:
            s = jnp.where(keep, s, NEG_INF)

        # online softmax update (f32 on the VPU/EUP)
        m_prev = m_sc[...]
        m_new = jnp.maximum(m_prev, s.max(axis=-1, keepdims=True))
        alpha = jnp.exp(m_prev - m_new)
        p = jnp.exp(s - m_new)                          # (tq, tk) f32
        l_sc[...] = alpha * l_sc[...] + p.sum(axis=-1, keepdims=True)

        # p @ v with bf16 operands (standard flash practice), f32 accumulate.
        acc_sc[...] = alpha * acc_sc[...] + jnp.dot(
            p.astype(v_ref.dtype), v_ref[0],
            preferred_element_type=jnp.float32)
        m_sc[...] = m_new

    if causal:
        first_q = qi * tq
        last_q = first_q + (tq - 1)
        first_k = ki * tk
        last_k = first_k + (tk - 1)
        has_any = first_k <= last_q        # at least one (q >= k) pair in tile
        needs_mask = last_k > first_q      # tile straddles the diagonal
        if has_kpm:
            # skip kv tiles that are entirely beyond this batch's valid keys
            has_any = jnp.logical_and(has_any, first_k < lens_ref[bh // H])

        # Fully-below-diagonal tiles: no causal select needed.
        @pl.when(jnp.logical_and(has_any, jnp.logical_not(needs_mask)))
        def _():
            compute(apply_causal=False)

        # Diagonal-straddling tiles: apply the causal mask.
        @pl.when(jnp.logical_and(has_any, needs_mask))
        def _():
            compute(apply_causal=True)
        # Fully-above-diagonal (or fully-padded) tiles: skipped entirely; the
        # k/v index_maps are also clamped so no HBM DMA is issued for them.
        # Note: a query row with zero valid keys (length-0 batch) is a
        # pathological case; like the -1e30 reference it is not meaningful.
    else:
        if has_kpm:
            @pl.when(ki * tk < lens_ref[bh // H])
            def _():
                compute(apply_causal=False)
        else:
            compute(apply_causal=False)

    # finalize at the last kv tile (runs even if that tile was skipped)
    @pl.when(ki == pl.num_programs(2) - 1)
    def _():
        inv_l = pl.reciprocal(l_sc[...], approx=True)   # EUP, not VALU divide
        o_ref[0] = (acc_sc[...] * inv_l).astype(o_ref.dtype)


def flash_attention(q, k, v, key_padding_mask=None, causal=False,
                    softmax_scale=None, *, block_q=512, block_k=1024):
    """q, k, v: (B, S, H, D) bf16.  key_padding_mask: (B, S_kv) bool or None.

    Returns (output, None), output: (B, S_q, H, D) bf16 — matches the
    PyTorch FlashAttention.forward signature/semantics (dropout_p = 0).
    """
    assert q.dtype in (jnp.float16, jnp.bfloat16)
    B, Sq, H, D = q.shape
    _, Skv, _, _ = k.shape
    scale = (float(softmax_scale) if softmax_scale is not None
             else 1.0 / math.sqrt(D))

    tq = min(block_q, Sq)
    tk = min(block_k, Skv)
    assert Sq % tq == 0 and Skv % tk == 0

    # TODO(synk): the (B,S,H,D)<->(B*H,S,D) relayouts below each cost a full
    # HBM pass; when integrating into a model, accept/produce (B,H,S,D) from
    # the surrounding ops instead of transposing here.
    def to_bh(x, S):
        return jnp.transpose(x, (0, 2, 1, 3)).reshape(B * H, S, x.shape[-1])

    qt = to_bh(q, Sq)
    kt = to_bh(k, Skv)
    vt = to_bh(v, Skv)

    has_kpm = key_padding_mask is not None
    grid = (B * H, Sq // tq, Skv // tk)

    if has_kpm:
        kpm_bool = key_padding_mask.astype(jnp.bool_)
        # per-batch mask, shared across heads via the index_map (no B*H copy)
        mask = kpm_bool.astype(jnp.int32).reshape(B, 1, Skv)
        # per-batch "valid length" = index of last kept key + 1 (0 if none);
        # used only to SKIP work — the per-key mask still handles arbitrary
        # (non-prefix) padding patterns exactly.
        pos = jnp.arange(Skv, dtype=jnp.int32)
        lengths = jnp.max(jnp.where(kpm_bool, pos[None, :] + 1, 0),
                          axis=-1).astype(jnp.int32)

        def last_kv_block(lens, bh):
            return jnp.maximum(lens[bh // H] - 1, 0) // tk

        q_map = lambda bh, qi, ki, lens: (bh, qi, 0)
        if causal:
            kv_map = lambda bh, qi, ki, lens: (
                bh,
                jnp.minimum(jnp.minimum(ki, ((qi + 1) * tq - 1) // tk),
                            last_kv_block(lens, bh)),
                0)
        else:
            kv_map = lambda bh, qi, ki, lens: (
                bh, jnp.minimum(ki, last_kv_block(lens, bh)), 0)
        mask_map = lambda bh, qi, ki, lens: (
            bh // H, 0, kv_map(bh, qi, ki, lens)[1])

        num_prefetch = 1
        args = [lengths, qt, kt, vt, mask]
        in_specs = [
            pl.BlockSpec((1, tq, D), q_map),
            pl.BlockSpec((1, tk, D), kv_map),
            pl.BlockSpec((1, tk, D), kv_map),
            pl.BlockSpec((1, 1, tk), mask_map),
        ]
        out_spec = pl.BlockSpec((1, tq, D), q_map)
    else:
        q_map = lambda bh, qi, ki: (bh, qi, 0)
        if causal:
            # clamp: above-diagonal kv tiles map to the last useful block ->
            # Pallas does not re-issue the DMA when the block index repeats.
            kv_map = lambda bh, qi, ki: (
                bh, jnp.minimum(ki, ((qi + 1) * tq - 1) // tk), 0)
        else:
            kv_map = lambda bh, qi, ki: (bh, ki, 0)
        num_prefetch = 0
        args = [qt, kt, vt]
        in_specs = [
            pl.BlockSpec((1, tq, D), q_map),
            pl.BlockSpec((1, tk, D), kv_map),
            pl.BlockSpec((1, tk, D), kv_map),
        ]
        out_spec = pl.BlockSpec((1, tq, D), q_map)

    kernel = functools.partial(_flash_attn_kernel, scale=scale, causal=causal,
                               has_kpm=has_kpm, tq=tq, tk=tk, H=H)

    # VMEM at the defaults (tq=512, tk=1024, D=64, bf16): q/k/v/out blocks
    # (double-buffered) + f32 scratch + the compiler's (tq,tk) f32 score
    # intermediates total a few MiB — comfortably within the default scoped
    # VMEM limit on v5e/v6e/v7x, so no vmem_limit override is needed.
    out_bh = pl.pallas_call(
        kernel,
        out_shape=jax.ShapeDtypeStruct((B * H, Sq, D), q.dtype),
        grid_spec=pltpu.PrefetchScalarGridSpec(
            num_scalar_prefetch=num_prefetch,
            grid=grid,
            in_specs=in_specs,
            out_specs=out_spec,
            scratch_shapes=[
                pltpu.VMEM((tq, D), q.dtype),      # scaled q tile (bf16)
                pltpu.VMEM((tq, 1), jnp.float32),  # running max m
                pltpu.VMEM((tq, 1), jnp.float32),  # running denom l
                pltpu.VMEM((tq, D), jnp.float32),  # output accumulator
            ],
        ),
        compiler_params=pltpu.CompilerParams(
            dimension_semantics=("parallel", "parallel", "arbitrary")),
    )(*args)

    # (B*H, Sq, D) -> (B, Sq, H, D)
    out = out_bh.reshape(B, H, Sq, D).transpose(0, 2, 1, 3)
    return out, None


def _reference_attention(q, k, v, key_padding_mask=None, causal=False,
                         softmax_scale=None):
    B, Sq, H, D = q.shape
    Skv = k.shape[1]
    scale = softmax_scale if softmax_scale is not None else 1.0 / math.sqrt(D)
    qf = q.astype(jnp.float32)
    kf = k.astype(jnp.float32)
    vf = v.astype(jnp.float32)
    s = jnp.einsum("bqhd,bkhd->bhqk", qf, kf) * scale
    if key_padding_mask is not None:
        s = jnp.where(key_padding_mask[:, None, None, :], s, NEG_INF)
    if causal:
        qpos = jnp.arange(Sq)[:, None]
        kpos = jnp.arange(Skv)[None, :]
        s = jnp.where((qpos >= kpos)[None, None], s, NEG_INF)
    p = jax.nn.softmax(s, axis=-1)
    o = jnp.einsum("bhqk,bkhd->bqhd", p, vf)
    return o.astype(q.dtype)


if __name__ == "__main__":
    B, S, H, D = 2, 256, 2, 64
    key = jax.random.PRNGKey(0)
    kq, kk, kv = jax.random.split(key, 3)
    q = jax.random.normal(kq, (B, S, H, D), dtype=jnp.bfloat16)
    k = jax.random.normal(kk, (B, S, H, D), dtype=jnp.bfloat16)
    v = jax.random.normal(kv, (B, S, H, D), dtype=jnp.bfloat16)

    # key padding mask: first batch keeps 192 keys, second keeps 128
    lengths = jnp.array([192, 128], dtype=jnp.int32)
    key_padding_mask = jnp.arange(S)[None, :] < lengths[:, None]

    def check(out, ref):
        assert jnp.allclose(out.astype(jnp.float32), ref.astype(jnp.float32),
                            atol=2e-2, rtol=2e-2)

    # path 1: no mask, non-causal, default (large) tiles
    out1, _ = flash_attention(q, k, v, key_padding_mask=None, causal=False)
    out1 = jax.block_until_ready(out1)
    check(out1, _reference_attention(q, k, v, None, causal=False))

    # path 2: no mask, causal, small tiles (exercises multi-kv-tile online
    # softmax, the below/straddle diagonal split and the kv DMA clamp)
    out2, _ = flash_attention(q, k, v, key_padding_mask=None, causal=True,
                              block_q=128, block_k=128)
    out2 = jax.block_until_ready(out2)
    check(out2, _reference_attention(q, k, v, None, causal=True))

    # path 3: key padding mask + causal, small tiles (exercises scalar
    # prefetch lengths, padded-tile skip and combined causal+kpm masking)
    out3, _ = flash_attention(q, k, v, key_padding_mask=key_padding_mask,
                              causal=True, block_q=128, block_k=128)
    out3 = jax.block_until_ready(out3)
    check(out3, _reference_attention(q, k, v, key_padding_mask, causal=True))

    # path 4: key padding mask, non-causal, small tiles
    out4, _ = flash_attention(q, k, v, key_padding_mask=key_padding_mask,
                              causal=False, block_q=128, block_k=128)
    out4 = jax.block_until_ready(out4)
    check(out4, _reference_attention(q, k, v, key_padding_mask, causal=False))

    # TODO(synk): attention_dropout > 0 in training mode not implemented
    # (module applies 0.0 in eval, which is what we reproduce).
    print("KERNEL_OK")
</pallas_src>

<mosaic_0001>
module attributes {stable_mosaic.version = 11 : i64} {
  func.func @_flash_attn_kernel(%arg0: i32, %arg1: i32, %arg2: i32, %arg3: memref<1x256x64xbf16, #tpu.memory_space<vmem>>, %arg4: memref<1x256x64xbf16, #tpu.memory_space<vmem>>, %arg5: memref<1x256x64xbf16, #tpu.memory_space<vmem>>, %arg6: memref<1x256x64xbf16, #tpu.memory_space<vmem>>, %arg7: memref<256x64xbf16, #tpu.memory_space<vmem>>, %arg8: memref<256x1xf32, #tpu.memory_space<vmem>>, %arg9: memref<256x1xf32, #tpu.memory_space<vmem>>, %arg10: memref<256x64xf32, #tpu.memory_space<vmem>>) attributes {dimension_semantics = [#tpu.dimension_semantics<parallel>, #tpu.dimension_semantics<parallel>, #tpu.dimension_semantics<arbitrary>], iteration_bounds = array<i64: 4, 1, 1>, scalar_prefetch = 0 : i64, scratch_operands = 4 : i64, tpu.core_type = #tpu.core_type<tc>, window_params = [{transform_indices = @transform_0, window_bounds = array<i64: 1, 256, 64>}, {transform_indices = @transform_1, window_bounds = array<i64: 1, 256, 64>}, {transform_indices = @transform_2, window_bounds = array<i64: 1, 256, 64>}, {transform_indices = @transform_3, window_bounds = array<i64: 1, 256, 64>}]} {
    %c0_i32 = arith.constant 0 : i32
    %0 = arith.cmpi eq, %arg2, %c0_i32 : i32
    %1 = arith.extui %0 : i1 to i32
    %c0_i32_0 = arith.constant 0 : i32
    %2 = arith.cmpi ne, %1, %c0_i32_0 : i32
    scf.if %2 {
      %c0_25 = arith.constant 0 : index
      %c0_26 = arith.constant 0 : index
      %c0_27 = arith.constant 0 : index
      %35 = vector.load %arg3[%c0_25, %c0_26, %c0_27] : memref<1x256x64xbf16, #tpu.memory_space<vmem>>, vector<1x256x64xbf16>
      %36 = vector.shape_cast %35 : vector<1x256x64xbf16> to vector<256x64xbf16>
      %37 = arith.extf %36 : vector<256x64xbf16> to vector<256x64xf32>
      %cst_28 = arith.constant 1.250000e-01 : f32
      %38 = vector.broadcast %cst_28 : f32 to vector<256x64xf32>
      %39 = arith.mulf %37, %38 : vector<256x64xf32>
      %40 = arith.truncf %39 : vector<256x64xf32> to vector<256x64xbf16>
      %c0_29 = arith.constant 0 : index
      %c0_30 = arith.constant 0 : index
      %41 = vector.load %arg7[%c0_29, %c0_30] : memref<256x64xbf16, #tpu.memory_space<vmem>>, vector<256x64xbf16>
      tpu.vector_store %arg7[%c0_29, %c0_30], %40 {strides = array<i32>} : memref<256x64xbf16, #tpu.memory_space<vmem>>, vector<256x64xbf16>,
      %cst_31 = arith.constant -1.000000e+30 : f32
      %42 = vector.broadcast %cst_31 : f32 to vector<256x1xf32>
      %c0_32 = arith.constant 0 : index
      %c0_33 = arith.constant 0 : index
      %43 = vector.load %arg8[%c0_32, %c0_33] : memref<256x1xf32, #tpu.memory_space<vmem>>, vector<256x1xf32>
      tpu.vector_store %arg8[%c0_32, %c0_33], %42 {strides = array<i32>} : memref<256x1xf32, #tpu.memory_space<vmem>>, vector<256x1xf32>,
      %cst_34 = arith.constant 0.000000e+00 : f32
      %44 = vector.broadcast %cst_34 : f32 to vector<256x1xf32>
      %c0_35 = arith.constant 0 : index
      %c0_36 = arith.constant 0 : index
      %45 = vector.load %arg9[%c0_35, %c0_36] : memref<256x1xf32, #tpu.memory_space<vmem>>, vector<256x1xf32>
      tpu.vector_store %arg9[%c0_35, %c0_36], %44 {strides = array<i32>} : memref<256x1xf32, #tpu.memory_space<vmem>>, vector<256x1xf32>,
      %cst_37 = arith.constant 0.000000e+00 : f32
      %46 = vector.broadcast %cst_37 : f32 to vector<256x64xf32>
      %c0_38 = arith.constant 0 : index
      %c0_39 = arith.constant 0 : index
      %47 = vector.load %arg10[%c0_38, %c0_39] : memref<256x64xf32, #tpu.memory_space<vmem>>, vector<256x64xf32>
      tpu.vector_store %arg10[%c0_38, %c0_39], %46 {strides = array<i32>} : memref<256x64xf32, #tpu.memory_space<vmem>>, vector<256x64xf32>,
    } else {
    }
    %c0 = arith.constant 0 : index
    %c0_1 = arith.constant 0 : index
    %3 = vector.load %arg7[%c0, %c0_1] : memref<256x64xbf16, #tpu.memory_space<vmem>>, vector<256x64xbf16>
    %c0_2 = arith.constant 0 : index
    %c0_3 = arith.constant 0 : index
    %c0_4 = arith.constant 0 : index
    %4 = vector.load %arg4[%c0_2, %c0_3, %c0_4] : memref<1x256x64xbf16, #tpu.memory_space<vmem>>, vector<1x256x64xbf16>
    %5 = vector.shape_cast %4 : vector<1x256x64xbf16> to vector<256x64xbf16>
    %cst = arith.constant dense<0.000000e+00> : vector<256x256xf32>
    %6 = tpu.matmul %3, %5, %cst {dimension_numbers = #tpu.dot_dimension_numbers<[1], [1], [0], [0], [0, 0, 1, 0], [], []>} : vector<256x64xbf16>, vector<256x64xbf16>, vector<256x256xf32> -> vector<256x256xf32>
    %c0_5 = arith.constant 0 : index
    %c0_6 = arith.constant 0 : index
    %7 = vector.load %arg8[%c0_5, %c0_6] : memref<256x1xf32, #tpu.memory_space<vmem>>, vector<256x1xf32>
    %cst_7 = arith.constant dense<0xFF800000> : vector<256xf32>
    %8 = vector.multi_reduction <maximumf>, %6, %cst_7 [1] : vector<256x256xf32> to vector<256xf32>
    %9 = vector.shape_cast %8 : vector<256xf32> to vector<256x1xf32>
    %10 = arith.maximumf %7, %9 : vector<256x1xf32>
    %11 = arith.subf %7, %10 : vector<256x1xf32>
    %12 = math.exp %11 : vector<256x1xf32>
    %13 = vector.broadcast %10 : vector<256x1xf32> to vector<256x256xf32>
    %14 = arith.subf %6, %13 : vector<256x256xf32>
    %15 = math.exp %14 : vector<256x256xf32>
    %c0_8 = arith.constant 0 : index
    %c0_9 = arith.constant 0 : index
    %16 = vector.load %arg9[%c0_8, %c0_9] : memref<256x1xf32, #tpu.memory_space<vmem>>, vector<256x1xf32>
    %17 = arith.mulf %12, %16 : vector<256x1xf32>
    %cst_10 = arith.constant dense<0.000000e+00> : vector<256xf32>
    %18 = vector.multi_reduction <add>, %15, %cst_10 [1] : vector<256x256xf32> to vector<256xf32>
    %19 = vector.shape_cast %18 : vector<256xf32> to vector<256x1xf32>
    %20 = arith.addf %17, %19 : vector<256x1xf32>
    %c0_11 = arith.constant 0 : index
    %c0_12 = arith.constant 0 : index
    %21 = vector.load %arg9[%c0_11, %c0_12] : memref<256x1xf32, #tpu.memory_space<vmem>>, vector<256x1xf32>
    tpu.vector_store %arg9[%c0_11, %c0_12], %20 {strides = array<i32>} : memref<256x1xf32, #tpu.memory_space<vmem>>, vector<256x1xf32>,
    %c0_13 = arith.constant 0 : index
    %c0_14 = arith.constant 0 : index
    %22 = vector.load %arg10[%c0_13, %c0_14] : memref<256x64xf32, #tpu.memory_space<vmem>>, vector<256x64xf32>
    %23 = vector.broadcast %12 : vector<256x1xf32> to vector<256x64xf32>
    %24 = arith.mulf %23, %22 : vector<256x64xf32>
    %25 = arith.truncf %15 : vector<256x256xf32> to vector<256x256xbf16>
    %c0_15 = arith.constant 0 : index
    %c0_16 = arith.constant 0 : index
    %c0_17 = arith.constant 0 : index
    %26 = vector.load %arg5[%c0_15, %c0_16, %c0_17] : memref<1x256x64xbf16, #tpu.memory_space<vmem>>, vector<1x256x64xbf16>
    %27 = vector.shape_cast %26 : vector<1x256x64xbf16> to vector<256x64xbf16>
    %cst_18 = arith.constant dense<0.000000e+00> : vector<256x64xf32>
    %28 = tpu.matmul %25, %27, %cst_18 {dimension_numbers = #tpu.dot_dimension_numbers<[1], [0], [0], [1], [0, 0, 1, 1], [], []>} : vector<256x256xbf16>, vector<256x64xbf16>, vector<256x64xf32> -> vector<256x64xf32>
    %29 = arith.addf %24, %28 : vector<256x64xf32>
    %c0_19 = arith.constant 0 : index
    %c0_20 = arith.constant 0 : index
    %30 = vector.load %arg10[%c0_19, %c0_20] : memref<256x64xf32, #tpu.memory_space<vmem>>, vector<256x64xf32>
    tpu.vector_store %arg10[%c0_19, %c0_20], %29 {strides = array<i32>} : memref<256x64xf32, #tpu.memory_space<vmem>>, vector<256x64xf32>,
    %c0_21 = arith.constant 0 : index
    %c0_22 = arith.constant 0 : index
    %31 = vector.load %arg8[%c0_21, %c0_22] : memref<256x1xf32, #tpu.memory_space<vmem>>, vector<256x1xf32>
    tpu.vector_store %arg8[%c0_21, %c0_22], %10 {strides = array<i32>} : memref<256x1xf32, #tpu.memory_space<vmem>>, vector<256x1xf32>,
    %c0_i32_23 = arith.constant 0 : i32
    %32 = arith.cmpi eq, %arg2, %c0_i32_23 : i32
    %33 = arith.extui %32 : i1 to i32
    %c0_i32_24 = arith.constant 0 : i32
    %34 = arith.cmpi ne, %33, %c0_i32_24 : i32
    scf.if %34 {
      %c0_25 = arith.constant 0 : index
      %c0_26 = arith.constant 0 : index
      %35 = vector.load %arg9[%c0_25, %c0_26] : memref<256x1xf32, #tpu.memory_space<vmem>>, vector<256x1xf32>
      %36 = tpu.reciprocal %35 {approx = true} : vector<256x1xf32> -> vector<256x1xf32>
      %c0_27 = arith.constant 0 : index
      %c0_28 = arith.constant 0 : index
      %37 = vector.load %arg10[%c0_27, %c0_28] : memref<256x64xf32, #tpu.memory_space<vmem>>, vector<256x64xf32>
      %38 = vector.broadcast %36 : vector<256x1xf32> to vector<256x64xf32>
      %39 = arith.mulf %37, %38 : vector<256x64xf32>
      %40 = arith.truncf %39 : vector<256x64xf32> to vector<256x64xbf16>
      %c0_29 = arith.constant 0 : index
      %c0_30 = arith.constant 0 : index
      %c0_31 = arith.constant 0 : index
      %41 = vector.load %arg6[%c0_29, %c0_30, %c0_31] : memref<1x256x64xbf16, #tpu.memory_space<vmem>>, vector<1x256x64xbf16>
      %42 = vector.shape_cast %41 : vector<1x256x64xbf16> to vector<256x64xbf16>
      %43 = vector.shape_cast %40 : vector<256x64xbf16> to vector<1x256x64xbf16>
      tpu.vector_store %arg6[%c0_29, %c0_30, %c0_31], %43 {strides = array<i32>} : memref<1x256x64xbf16, #tpu.memory_space<vmem>>, vector<1x256x64xbf16>,
    } else {
    }
    return
  }
  func.func @transform_0(%arg0: i32, %arg1: i32, %arg2: i32) -> (i32, i32, i32) {
    %c0_i32 = arith.constant 0 : i32
    %c0_i32_0 = arith.constant 0 : i32
    return %arg0, %arg1, %c0_i32 : i32, i32, i32
  }
  func.func @transform_1(%arg0: i32, %arg1: i32, %arg2: i32) -> (i32, i32, i32) {
    %c0_i32 = arith.constant 0 : i32
    %c0_i32_0 = arith.constant 0 : i32
    return %arg0, %arg2, %c0_i32 : i32, i32, i32
  }
  func.func @transform_2(%arg0: i32, %arg1: i32, %arg2: i32) -> (i32, i32, i32) {
    %c0_i32 = arith.constant 0 : i32
    %c0_i32_0 = arith.constant 0 : i32
    return %arg0, %arg2, %c0_i32 : i32, i32, i32
  }
  func.func @transform_3(%arg0: i32, %arg1: i32, %arg2: i32) -> (i32, i32, i32) {
    %c0_i32 = arith.constant 0 : i32
    %c0_i32_0 = arith.constant 0 : i32
    return %arg0, %arg1, %c0_i32 : i32, i32, i32
  }
}

</mosaic_0001>

<llo_original>
// kernel: tpu_custom_call.1
$region0: #{tpu_custom_call.1}
  #allocation0 [shape = 'u32[]', space=smem, size = 0x4, offset = 0x4, fixed_abs, tag = 'smem constant byte address 0x4 - core index']
  #allocation1 [shape = 'u32[72,128]{1,0:T(1,128)}', space=vmem, size = 0x9000, scoped, tag = 'internal scratch']
  #allocation2 [shape = 'bf16[256,64]{1,0:T(8,128)(2,1)}', space=vmem, size = 0x10000, scoped, tag = 'scratch operand']
  #allocation3 [shape = 'f32[256,1]{1,0:T(8,128)}', space=vmem, size = 0x20000, scoped, tag = 'scratch operand']
  #allocation4 [shape = 'f32[256,1]{1,0:T(8,128)}', space=vmem, size = 0x20000, scoped, tag = 'scratch operand']
  #allocation5 [shape = 'f32[256,64]{1,0:T(8,128)}', space=vmem, size = 0x20000, scoped, tag = 'scratch operand']
  %s0 = inlined_call_operand.vmem [shape: bf16[4,256,64], index: 0, kind: input, shape index: {}]
  %s1 = inlined_call_operand.vmem [shape: bf16[4,256,64], index: 1, kind: input, shape index: {}]
  %s2 = inlined_call_operand.vmem [shape: bf16[4,256,64], index: 2, kind: input, shape index: {}]
  %s3 = inlined_call_operand.vmem [shape: bf16[4,256,64], index: 3, kind: output, shape index: {}]
  %s4 = sld [smem:[#allocation0]]
  $region53: #{tpu_custom_call.1} parent=0
    _
  %s6 = ssub.s32 1, %s4
  %s7 = scalar_select 0, %s6, %s4
  loop: start=0, step=1, limit=6
  $region2: #{tpu_custom_call.1} parent=0 // loop_pre_header
    _
  $region3: #{tpu_custom_call.1} parent=0 // loop_header
    %s9 = sphi 0, %s13
    %p10 = scmp.ge.s32.totalorder %s9, 6
    %s16 = sphi 0, %s35
    %s17 = sphi 0, %s31
    %s18 = sphi 0, %s27
    %s19 = sphi 0, %s16
    %s20 = sphi 0, %s17
    %s21 = sphi 0, %s18
    %s22 = sphi 0, %s19
    %s23 = sphi 0, %s20
    %s24 = sphi 0, %s21
    %s40 = sphi 0, %s42
    %s43 = sphi 0, %s40
    %s44 = sphi 0, %s43
    %s60 = sphi 0, %s44
    %s68 = sphi 0, %s70
    %s71 = sphi 0, %s68
    %s72 = sphi 0, %s71
    %s88 = sphi 0, %s72
    %s96 = sphi 0, %s98
    %s99 = sphi 0, %s96
    %s100 = sphi 0, %s99
    %s116 = sphi 0, %s100
    %s124 = sphi 0, %s126
    %s127 = sphi 0, %s124
    %s128 = sphi 0, %s127
    %s144 = sphi 0, %s128
  $region4: #{tpu_custom_call.1} parent=0 // loop_header_branch
    %12 = sbr.rel (%p10) target = $region8
  $region5: #{tpu_custom_call.1} parent=0 // loop_body
    %s14 = ssub.s32 %s9, 1
    %s15 = ssub.s32 %s9, 2
    %s25 = sadd.s32 1, %s18
    %p26 = scmp.ge.s32.totalorder %s25, 1
    %s27 = scalar_select %p26, 0, %s25
    %s28 = sadd.s32 1, %s17
    %s29 = scalar_select %p26, %s28, %s17
    %p30 = scmp.ge.s32.totalorder %s29, 1
    %s31 = scalar_select %p30, 0, %s29
    %s32 = sadd.s32 1, %s16
    %s33 = scalar_select %p30, %s32, %s16
    %p34 = scmp.ge.s32.totalorder %s33, 4
    %s35 = scalar_select %p34, 0, %s33
    %s36 = ssub.s32 %s16, %s35
    %s37 = ssub.s32 %s17, %s31
    %s38 = sor.u32 %s36, %s37
    %p39 = scmp.eq.s32.totalorder %s38, 0
    %s41 = sadd.s32 %s40, 1
    %s42 = scalar_select %p39, %s40, %s41
    %p45 = pneg %p39
    %p46 = scmp.eq.s32.totalorder %s9, 3
    %p47 = por %p45, %p46
    %p48 = scmp.ne.s32.totalorder %s40, %s43
    %p49 = scmp.eq.s32.totalorder %s9, 0
    %p50 = por %p48, %p49
    %p51 = scmp.ne.s32.totalorder %s40, %s43
    %p52 = scmp.eq.s32.totalorder %s14, 3
    %p53 = por %p51, %p52
    %p54 = scmp.ne.s32.totalorder %s43, %s44
    %p55 = scmp.eq.s32.totalorder %s14, 0
    %p56 = por %p54, %p55
    %p57 = scmp.ne.s32.totalorder %s43, %s44
    %p58 = scmp.eq.s32.totalorder %s15, 3
    %p59 = por %p57, %p58
    %p61 = scmp.ne.s32.totalorder %s44, %s60
    %p62 = scmp.eq.s32.totalorder %s15, 0
    %p63 = por %p61, %p62
    %s64 = ssub.s32 %s16, %s35
    %s65 = ssub.s32 %s18, %s27
    %s66 = sor.u32 %s64, %s65
    %p67 = scmp.eq.s32.totalorder %s66, 0
    %s69 = sadd.s32 %s68, 1
    %s70 = scalar_select %p67, %s68, %s69
    %p73 = pneg %p67
    %p74 = scmp.eq.s32.totalorder %s9, 3
    %p75 = por %p73, %p74
    %p76 = scmp.ne.s32.totalorder %s68, %s71
    %p77 = scmp.eq.s32.totalorder %s9, 0
    %p78 = por %p76, %p77
    %p79 = scmp.ne.s32.totalorder %s68, %s71
    %p80 = scmp.eq.s32.totalorder %s14, 3
    %p81 = por %p79, %p80
    %p82 = scmp.ne.s32.totalorder %s71, %s72
    %p83 = scmp.eq.s32.totalorder %s14, 0
    %p84 = por %p82, %p83
    %p85 = scmp.ne.s32.totalorder %s71, %s72
    %p86 = scmp.eq.s32.totalorder %s15, 3
    %p87 = por %p85, %p86
    %p89 = scmp.ne.s32.totalorder %s72, %s88
    %p90 = scmp.eq.s32.totalorder %s15, 0
    %p91 = por %p89, %p90
    %s92 = ssub.s32 %s16, %s35
    %s93 = ssub.s32 %s18, %s27
    %s94 = sor.u32 %s92, %s93
    %p95 = scmp.eq.s32.totalorder %s94, 0
    %s97 = sadd.s32 %s96, 1
    %s98 = scalar_select %p95, %s96, %s97
    %p101 = pneg %p95
    %p102 = scmp.eq.s32.totalorder %s9, 3
    %p103 = por %p101, %p102
    %p104 = scmp.ne.s32.totalorder %s96, %s99
    %p105 = scmp.eq.s32.totalorder %s9, 0
    %p106 = por %p104, %p105
    %p107 = scmp.ne.s32.totalorder %s96, %s99
    %p108 = scmp.eq.s32.totalorder %s14, 3
    %p109 = por %p107, %p108
    %p110 = scmp.ne.s32.totalorder %s99, %s100
    %p111 = scmp.eq.s32.totalorder %s14, 0
    %p112 = por %p110, %p111
    %p113 = scmp.ne.s32.totalorder %s99, %s100
    %p114 = scmp.eq.s32.totalorder %s15, 3
    %p115 = por %p113, %p114
    %p117 = scmp.ne.s32.totalorder %s100, %s116
    %p118 = scmp.eq.s32.totalorder %s15, 0
    %p119 = por %p117, %p118
    %s120 = ssub.s32 %s16, %s35
    %s121 = ssub.s32 %s17, %s31
    %s122 = sor.u32 %s120, %s121
    %p123 = scmp.eq.s32.totalorder %s122, 0
    %s125 = sadd.s32 %s124, 1
    %s126 = scalar_select %p123, %s124, %s125
    %p129 = pneg %p123
    %p130 = scmp.eq.s32.totalorder %s9, 3
    %p131 = por %p129, %p130
    %p132 = scmp.ne.s32.totalorder %s124, %s127
    %p133 = scmp.eq.s32.totalorder %s9, 0
    %p134 = por %p132, %p133
    %p135 = scmp.ne.s32.totalorder %s124, %s127
    %p136 = scmp.eq.s32.totalorder %s14, 3
    %p137 = por %p135, %p136
    %p138 = scmp.ne.s32.totalorder %s127, %s128
    %p139 = scmp.eq.s32.totalorder %s14, 0
    %p140 = por %p138, %p139
    %p141 = scmp.ne.s32.totalorder %s127, %s128
    %p142 = scmp.eq.s32.totalorder %s15, 3
    %p143 = por %p141, %p142
    %p145 = scmp.ne.s32.totalorder %s128, %s144
    %p146 = scmp.eq.s32.totalorder %s15, 0
    %p147 = por %p145, %p146
    %p148 = scmp.le.s32.totalorder 1, %s9
    %p149 = scmp.lt.s32.totalorder %s9, 5
    %p150 = pnand %p148, %p149
    %p151 = pneg %p150
    // Predicated region
    $region9: #{tpu_custom_call.1} parent=5 // pred_check
      _
    $region10: #{tpu_custom_call.1} parent=5 // pred_check_branch
      %153 = sbr.rel (%p150) target = $region12
    $region11: #{tpu_custom_call.1} parent=5 // pred_region
      %s154 = ssub.s32 %s9, 1
    $region12: #{tpu_custom_call.1} parent=5 // pred_fallthru
      _
    %p155 = scmp.lt.s32.totalorder %s9, 4
    // Predicated region
    $region13: #{tpu_custom_call.1} parent=5 // pred_check
      %p156 = pneg %p155
    $region14: #{tpu_custom_call.1} parent=5 // pred_check_branch
      %158 = sbr.rel (%p156) target = $region16
    $region15: #{tpu_custom_call.1} parent=5 // pred_region
      // Predicated region
      $region17: #{tpu_custom_call.1} parent=15 // pred_check
        %p159 = pneg %p50
      $region18: #{tpu_custom_call.1} parent=15 // pred_check_branch
        %161 = sbr.rel (%p159) target = $region20
      $region19: #{tpu_custom_call.1} parent=15 // pred_region
        %s162 = smul.u32 32, %s17
        %p163 = scmp.lt.s32.totalorder %s16, 3
        %s164 = scalar_select %p163, %s16, 3
        %p165 = scmp.lt.s32.totalorder %s162, 31
        %s166 = scalar_select %p165, %s162, 31
        %s167 = smul.addr %s164, 32
        %s168 = sadd.s32 %s166, %s167
        %s169 = smul.addr %s168, 4
        %s170 = scalar_lea.vmem %s0, %s169
        %s171 = smul.u32 32, %s17
      $region20: #{tpu_custom_call.1} parent=15 // pred_fallthru
        _
      // Predicated region
      $region21: #{tpu_custom_call.1} parent=15 // pred_check
        %p172 = pneg %p78
      $region22: #{tpu_custom_call.1} parent=15 // pred_check_branch
        %174 = sbr.rel (%p172) target = $region24
      $region23: #{tpu_custom_call.1} parent=15 // pred_region
        %s175 = smul.u32 32, %s18
        %p176 = scmp.lt.s32.totalorder %s16, 3
        %s177 = scalar_select %p176, %s16, 3
        %p178 = scmp.lt.s32.totalorder %s175, 31
        %s179 = scalar_select %p178, %s175, 31
        %s180 = smul.addr %s177, 32
        %s181 = sadd.s32 %s179, %s180
        %s182 = smul.addr %s181, 4
        %s183 = scalar_lea.vmem %s1, %s182
        %s184 = smul.u32 32, %s18
      $region24: #{tpu_custom_call.1} parent=15 // pred_fallthru
        _
      // Predicated region
      $region25: #{tpu_custom_call.1} parent=15 // pred_check
        %p185 = pneg %p106
      $region26: #{tpu_custom_call.1} parent=15 // pred_check_branch
        %187 = sbr.rel (%p185) target = $region28
      $region27: #{tpu_custom_call.1} parent=15 // pred_region
        %s188 = smul.u32 32, %s18
        %p189 = scmp.lt.s32.totalorder %s16, 3
        %s190 = scalar_select %p189, %s16, 3
        %p191 = scmp.lt.s32.totalorder %s188, 31
        %s192 = scalar_select %p191, %s188, 31
        %s193 = smul.addr %s190, 32
        %s194 = sadd.s32 %s192, %s193
        %s195 = smul.addr %s194, 4
        %s196 = scalar_lea.vmem %s2, %s195
        %s197 = smul.u32 32, %s18
      $region28: #{tpu_custom_call.1} parent=15 // pred_fallthru
        _
    $region16: #{tpu_custom_call.1} parent=5 // pred_fallthru
      _
    %p198 = scmp.le.s32.totalorder 1, %s9
    %p199 = scmp.lt.s32.totalorder %s9, 5
    %p200 = pnand %p198, %p199
    %p201 = pneg %p200
    // Predicated region
    $region29: #{tpu_custom_call.1} parent=5 // pred_check
      _
    $region30: #{tpu_custom_call.1} parent=5 // pred_check_branch
      %203 = sbr.rel (%p200) target = $region32
    $region31: #{tpu_custom_call.1} parent=5 // pred_region
      %s204 = ssub.s32 %s9, 1
      %s205 = smul.u32 32, %s20
      %p206 = scmp.lt.s32.totalorder %s19, 3
      %s207 = scalar_select %p206, %s19, 3
      %p208 = scmp.lt.s32.totalorder %s205, 31
      %s209 = scalar_select %p208, %s205, 31
      %s210 = smul.addr %s207, 32
      %s211 = sadd.s32 %s209, %s210
      %s212 = smul.addr %s211, 4
      %s213 = scalar_lea.vmem %s0, %s212
      %p214 = pneg %p56
      %p215 = pneg %p53
      %s216 = smul.u32 32, %s21
      %p217 = scmp.lt.s32.totalorder %s19, 3
      %s218 = scalar_select %p217, %s19, 3
      %p219 = scmp.lt.s32.totalorder %s216, 31
      %s220 = scalar_select %p219, %s216, 31
      %s221 = smul.addr %s218, 32
      %s222 = sadd.s32 %s220, %s221
      %s223 = smul.addr %s222, 4
      %s224 = scalar_lea.vmem %s1, %s223
      %p225 = pneg %p84
      %p226 = pneg %p81
      %s227 = smul.u32 32, %s21
      %p228 = scmp.lt.s32.totalorder %s19, 3
      %s229 = scalar_select %p228, %s19, 3
      %p230 = scmp.lt.s32.totalorder %s227, 31
      %s231 = scalar_select %p230, %s227, 31
      %s232 = smul.addr %s229, 32
      %s233 = sadd.s32 %s231, %s232
      %s234 = smul.addr %s233, 4
      %s235 = scalar_lea.vmem %s2, %s234
      %p236 = pneg %p112
      %p237 = pneg %p109
      %p238 = pneg %p140
      %p239 = pneg %p137
      %s240 = smul.u32 32, %s20
      %p241 = scmp.lt.s32.totalorder %s19, 3
      %s242 = scalar_select %p241, %s19, 3
      %p243 = scmp.lt.s32.totalorder %s240, 31
      %s244 = scalar_select %p243, %s240, 31
      %s245 = smul.addr %s242, 32
      %s246 = sadd.s32 %s244, %s245
      %s247 = smul.addr %s246, 4
      %s248 = scalar_lea.vmem %s3, %s247
      %s249 = smul.u32 32, %s20
      %p250 = scmp.lt.s32.totalorder %s19, 3
      %s251 = scalar_select %p250, %s19, 3
      %p252 = scmp.lt.s32.totalorder %s249, 31
      %s253 = scalar_select %p252, %s249, 31
      %s254 = smul.addr %s251, 32
      %s255 = sadd.s32 %s253, %s254
      %s256 = smul.addr %s255, 4
      %s257 = scalar_lea.vmem %s0, %s256
      %s258 = smul.u32 32, %s20
      %s259 = smul.u32 32, %s21
      %p260 = scmp.lt.s32.totalorder %s19, 3
      %s261 = scalar_select %p260, %s19, 3
      %p262 = scmp.lt.s32.totalorder %s259, 31
      %s263 = scalar_select %p262, %s259, 31
      %s264 = smul.addr %s261, 32
      %s265 = sadd.s32 %s263, %s264
      %s266 = smul.addr %s265, 4
      %s267 = scalar_lea.vmem %s1, %s266
      %s268 = smul.u32 32, %s21
      %s269 = smul.u32 32, %s21
      %p270 = scmp.lt.s32.totalorder %s19, 3
      %s271 = scalar_select %p270, %s19, 3
      %p272 = scmp.lt.s32.totalorder %s269, 31
      %s273 = scalar_select %p272, %s269, 31
      %s274 = smul.addr %s271, 32
      %s275 = sadd.s32 %s273, %s274
      %s276 = smul.addr %s275, 4
      %s277 = scalar_lea.vmem %s2, %s276
      %s278 = smul.u32 32, %s21
      %s279 = smul.u32 32, %s20
      %p280 = scmp.lt.s32.totalorder %s19, 3
      %s281 = scalar_select %p280, %s19, 3
      %p282 = scmp.lt.s32.totalorder %s279, 31
      %s283 = scalar_select %p282, %s279, 31
      %s284 = smul.addr %s281, 32
      %s285 = sadd.s32 %s283, %s284
      %s286 = smul.addr %s285, 4
      %s287 = scalar_lea.vmem %s3, %s286
      %s288 = smul.u32 32, %s20
      %p289 = scmp.eq.s32.totalorder %s21, 0
      // Predicated region
      $region33: #{tpu_custom_call.1} parent=31 // pred_check
        %p290 = pneg %p289
      $region34: #{tpu_custom_call.1} parent=31 // pred_check_branch
        %292 = sbr.rel (%p290) target = $region36
      $region35: #{tpu_custom_call.1} parent=31 // pred_region
        %v293 = vld [vmem:[%s257] sm:$0xf]
        %v294 = vld [vmem:[%s257 + $0x4] sm:$0xf]
        %v295 = vld [vmem:[%s257 + $0x8] sm:$0xf]
        %v296 = vld [vmem:[%s257 + $0xc] sm:$0xf]
        %v297 = vld [vmem:[%s257 + $0x10] sm:$0xf]
        %v298 = vld [vmem:[%s257 + $0x14] sm:$0xf]
        %v299 = vld [vmem:[%s257 + $0x18] sm:$0xf]
        %v300 = vld [vmem:[%s257 + $0x1c] sm:$0xf]
        %v301 = vld [vmem:[%s257 + $0x20] sm:$0xf]
        %v302 = vld [vmem:[%s257 + $0x24] sm:$0xf]
        %v303 = vld [vmem:[%s257 + $0x28] sm:$0xf]
        %v304 = vld [vmem:[%s257 + $0x2c] sm:$0xf]
        %v305 = vld [vmem:[%s257 + $0x30] sm:$0xf]
        %v306 = vld [vmem:[%s257 + $0x34] sm:$0xf]
        %v307 = vld [vmem:[%s257 + $0x38] sm:$0xf]
        %v308 = vld [vmem:[%s257 + $0x3c] sm:$0xf]
        %v309 = vld [vmem:[%s257 + $0x40] sm:$0xf]
        %v310 = vld [vmem:[%s257 + $0x44] sm:$0xf]
        %v311 = vld [vmem:[%s257 + $0x48] sm:$0xf]
        %v312 = vld [vmem:[%s257 + $0x4c] sm:$0xf]
        %v313 = vld [vmem:[%s257 + $0x50] sm:$0xf]
        %v314 = vld [vmem:[%s257 + $0x54] sm:$0xf]
        %v315 = vld [vmem:[%s257 + $0x58] sm:$0xf]
        %v316 = vld [vmem:[%s257 + $0x5c] sm:$0xf]
        %v317 = vld [vmem:[%s257 + $0x60] sm:$0xf]
        %v318 = vld [vmem:[%s257 + $0x64] sm:$0xf]
        %v319 = vld [vmem:[%s257 + $0x68] sm:$0xf]
        %v320 = vld [vmem:[%s257 + $0x6c] sm:$0xf]
        %v321 = vld [vmem:[%s257 + $0x70] sm:$0xf]
        %v322 = vld [vmem:[%s257 + $0x74] sm:$0xf]
        %v323 = vld [vmem:[%s257 + $0x78] sm:$0xf]
        %v324 = vld [vmem:[%s257 + $0x7c] sm:$0xf]
        %v325 = vunpack.c.l.bf16 %v293
        %v326 = vunpack.c.l.bf16 %v294
        %v327 = vunpack.c.l.bf16 %v295
        %v328 = vunpack.c.l.bf16 %v296
        %v329 = vunpack.c.l.bf16 %v297
        %v330 = vunpack.c.l.bf16 %v298
        %v331 = vunpack.c.l.bf16 %v299
        %v332 = vunpack.c.l.bf16 %v300
        %v333 = vunpack.c.l.bf16 %v301
        %v334 = vunpack.c.l.bf16 %v302
        %v335 = vunpack.c.l.bf16 %v303
        %v336 = vunpack.c.l.bf16 %v304
        %v337 = vunpack.c.l.bf16 %v305
        %v338 = vunpack.c.l.bf16 %v306
        %v339 = vunpack.c.l.bf16 %v307
        %v340 = vunpack.c.l.bf16 %v308
        %v341 = vunpack.c.l.bf16 %v309
        %v342 = vunpack.c.l.bf16 %v310
        %v343 = vunpack.c.l.bf16 %v311
        %v344 = vunpack.c.l.bf16 %v312
        %v345 = vunpack.c.l.bf16 %v313
        %v346 = vunpack.c.l.bf16 %v314
        %v347 = vunpack.c.l.bf16 %v315
        %v348 = vunpack.c.l.bf16 %v316
        %v349 = vunpack.c.l.bf16 %v317
        %v350 = vunpack.c.l.bf16 %v318
        %v351 = vunpack.c.l.bf16 %v319
        %v352 = vunpack.c.l.bf16 %v320
        %v353 = vunpack.c.l.bf16 %v321
        %v354 = vunpack.c.l.bf16 %v322
        %v355 = vunpack.c.l.bf16 %v323
        %v356 = vunpack.c.l.bf16 %v324
        %v357 = vmul.f32 %v325, 0.125
        %v358 = vmul.f32 %v326, 0.125
        %v359 = vmul.f32 %v327, 0.125
        %v360 = vmul.f32 %v328, 0.125
        %v361 = vmul.f32 %v329, 0.125
        %v362 = vmul.f32 %v330, 0.125
        %v363 = vmul.f32 %v331, 0.125
        %v364 = vmul.f32 %v332, 0.125
        %v365 = vmul.f32 %v333, 0.125
        %v366 = vmul.f32 %v334, 0.125
        %v367 = vmul.f32 %v335, 0.125
        %v368 = vmul.f32 %v336, 0.125
        %v369 = vmul.f32 %v337, 0.125
        %v370 = vmul.f32 %v338, 0.125
        %v371 = vmul.f32 %v339, 0.125
        %v372 = vmul.f32 %v340, 0.125
        %v373 = vmul.f32 %v341, 0.125
        %v374 = vmul.f32 %v342, 0.125
        %v375 = vmul.f32 %v343, 0.125
        %v376 = vmul.f32 %v344, 0.125
        %v377 = vmul.f32 %v345, 0.125
        %v378 = vmul.f32 %v346, 0.125
        %v379 = vmul.f32 %v347, 0.125
        %v380 = vmul.f32 %v348, 0.125
        %v381 = vmul.f32 %v349, 0.125
        %v382 = vmul.f32 %v350, 0.125
        %v383 = vmul.f32 %v351, 0.125
        %v384 = vmul.f32 %v352, 0.125
        %v385 = vmul.f32 %v353, 0.125
        %v386 = vmul.f32 %v354, 0.125
        %v387 = vmul.f32 %v355, 0.125
        %v388 = vmul.f32 %v356, 0.125
        %v389 = vpack.c.bf16 %v357, %v357
        %v390 = vpack.c.bf16 %v358, %v358
        %v391 = vpack.c.bf16 %v359, %v359
        %v392 = vpack.c.bf16 %v360, %v360
        %v393 = vpack.c.bf16 %v361, %v361
        %v394 = vpack.c.bf16 %v362, %v362
        %v395 = vpack.c.bf16 %v363, %v363
        %v396 = vpack.c.bf16 %v364, %v364
        %v397 = vpack.c.bf16 %v365, %v365
        %v398 = vpack.c.bf16 %v366, %v366
        %v399 = vpack.c.bf16 %v367, %v367
        %v400 = vpack.c.bf16 %v368, %v368
        %v401 = vpack.c.bf16 %v369, %v369
        %v402 = vpack.c.bf16 %v370, %v370
        %v403 = vpack.c.bf16 %v371, %v371
        %v404 = vpack.c.bf16 %v372, %v372
        %v405 = vpack.c.bf16 %v373, %v373
        %v406 = vpack.c.bf16 %v374, %v374
        %v407 = vpack.c.bf16 %v375, %v375
        %v408 = vpack.c.bf16 %v376, %v376
        %v409 = vpack.c.bf16 %v377, %v377
        %v410 = vpack.c.bf16 %v378, %v378
        %v411 = vpack.c.bf16 %v379, %v379
        %v412 = vpack.c.bf16 %v380, %v380
        %v413 = vpack.c.bf16 %v381, %v381
        %v414 = vpack.c.bf16 %v382, %v382
        %v415 = vpack.c.bf16 %v383, %v383
        %v416 = vpack.c.bf16 %v384, %v384
        %v417 = vpack.c.bf16 %v385, %v385
        %v418 = vpack.c.bf16 %v386, %v386
        %v419 = vpack.c.bf16 %v387, %v387
        %v420 = vpack.c.bf16 %v388, %v388
        %vm421 = vcmask 519168
        %422 = vst.msk [vmem:[#allocation2] sm:$0xf] %vm421, %v389
        %423 = vst.msk [vmem:[#allocation2 + $0x4] sm:$0xf] %vm421, %v390
        %424 = vst.msk [vmem:[#allocation2 + $0x8] sm:$0xf] %vm421, %v391
        %425 = vst.msk [vmem:[#allocation2 + $0xc] sm:$0xf] %vm421, %v392
        %426 = vst.msk [vmem:[#allocation2 + $0x10] sm:$0xf] %vm421, %v393
        %427 = vst.msk [vmem:[#allocation2 + $0x14] sm:$0xf] %vm421, %v394
        %428 = vst.msk [vmem:[#allocation2 + $0x18] sm:$0xf] %vm421, %v395
        %429 = vst.msk [vmem:[#allocation2 + $0x1c] sm:$0xf] %vm421, %v396
        %430 = vst.msk [vmem:[#allocation2 + $0x20] sm:$0xf] %vm421, %v397
        %431 = vst.msk [vmem:[#allocation2 + $0x24] sm:$0xf] %vm421, %v398
        %432 = vst.msk [vmem:[#allocation2 + $0x28] sm:$0xf] %vm421, %v399
        %433 = vst.msk [vmem:[#allocation2 + $0x2c] sm:$0xf] %vm421, %v400
        %434 = vst.msk [vmem:[#allocation2 + $0x30] sm:$0xf] %vm421, %v401
        %435 = vst.msk [vmem:[#allocation2 + $0x34] sm:$0xf] %vm421, %v402
        %436 = vst.msk [vmem:[#allocation2 + $0x38] sm:$0xf] %vm421, %v403
        %437 = vst.msk [vmem:[#allocation2 + $0x3c] sm:$0xf] %vm421, %v404
        %438 = vst.msk [vmem:[#allocation2 + $0x40] sm:$0xf] %vm421, %v405
        %439 = vst.msk [vmem:[#allocation2 + $0x44] sm:$0xf] %vm421, %v406
        %440 = vst.msk [vmem:[#allocation2 + $0x48] sm:$0xf] %vm421, %v407
        %441 = vst.msk [vmem:[#allocation2 + $0x4c] sm:$0xf] %vm421, %v408
        %442 = vst.msk [vmem:[#allocation2 + $0x50] sm:$0xf] %vm421, %v409
        %443 = vst.msk [vmem:[#allocation2 + $0x54] sm:$0xf] %vm421, %v410
        %444 = vst.msk [vmem:[#allocation2 + $0x58] sm:$0xf] %vm421, %v411
        %445 = vst.msk [vmem:[#allocation2 + $0x5c] sm:$0xf] %vm421, %v412
        %446 = vst.msk [vmem:[#allocation2 + $0x60] sm:$0xf] %vm421, %v413
        %447 = vst.msk [vmem:[#allocation2 + $0x64] sm:$0xf] %vm421, %v414
        %448 = vst.msk [vmem:[#allocation2 + $0x68] sm:$0xf] %vm421, %v415
        %449 = vst.msk [vmem:[#allocation2 + $0x6c] sm:$0xf] %vm421, %v416
        %450 = vst.msk [vmem:[#allocation2 + $0x70] sm:$0xf] %vm421, %v417
        %451 = vst.msk [vmem:[#allocation2 + $0x74] sm:$0xf] %vm421, %v418
        %452 = vst.msk [vmem:[#allocation2 + $0x78] sm:$0xf] %vm421, %v419
        %453 = vst.msk [vmem:[#allocation2 + $0x7c] sm:$0xf] %vm421, %v420
        %vm454 = vcmask 7168
        %455 = vst.msk [vmem:[#allocation3] sm:$0xff] %vm454, -1e+30
        %456 = vst.msk [vmem:[#allocation3 + $0x8] sm:$0xff] %vm454, -1e+30
        %457 = vst.msk [vmem:[#allocation3 + $0x10] sm:$0xff] %vm454, -1e+30
        %458 = vst.msk [vmem:[#allocation3 + $0x18] sm:$0xff] %vm454, -1e+30
        %459 = vst.msk [vmem:[#allocation3 + $0x20] sm:$0xff] %vm454, -1e+30
        %460 = vst.msk [vmem:[#allocation3 + $0x28] sm:$0xff] %vm454, -1e+30
        %461 = vst.msk [vmem:[#allocation3 + $0x30] sm:$0xff] %vm454, -1e+30
        %462 = vst.msk [vmem:[#allocation3 + $0x38] sm:$0xff] %vm454, -1e+30
        %463 = vst.msk [vmem:[#allocation3 + $0x40] sm:$0xff] %vm454, -1e+30
        %464 = vst.msk [vmem:[#allocation3 + $0x48] sm:$0xff] %vm454, -1e+30
        %465 = vst.msk [vmem:[#allocation3 + $0x50] sm:$0xff] %vm454, -1e+30
        %466 = vst.msk [vmem:[#allocation3 + $0x58] sm:$0xff] %vm454, -1e+30
        %467 = vst.msk [vmem:[#allocation3 + $0x60] sm:$0xff] %vm454, -1e+30
        %468 = vst.msk [vmem:[#allocation3 + $0x68] sm:$0xff] %vm454, -1e+30
        %469 = vst.msk [vmem:[#allocation3 + $0x70] sm:$0xff] %vm454, -1e+30
        %470 = vst.msk [vmem:[#allocation3 + $0x78] sm:$0xff] %vm454, -1e+30
        %471 = vst.msk [vmem:[#allocation3 + $0x80] sm:$0xff] %vm454, -1e+30
        %472 = vst.msk [vmem:[#allocation3 + $0x88] sm:$0xff] %vm454, -1e+30
        %473 = vst.msk [vmem:[#allocation3 + $0x90] sm:$0xff] %vm454, -1e+30
        %474 = vst.msk [vmem:[#allocation3 + $0x98] sm:$0xff] %vm454, -1e+30
        %475 = vst.msk [vmem:[#allocation3 + $0xa0] sm:$0xff] %vm454, -1e+30
        %476 = vst.msk [vmem:[#allocation3 + $0xa8] sm:$0xff] %vm454, -1e+30
        %477 = vst.msk [vmem:[#allocation3 + $0xb0] sm:$0xff] %vm454, -1e+30
        %478 = vst.msk [vmem:[#allocation3 + $0xb8] sm:$0xff] %vm454, -1e+30
        %479 = vst.msk [vmem:[#allocation3 + $0xc0] sm:$0xff] %vm454, -1e+30
        %480 = vst.msk [vmem:[#allocation3 + $0xc8] sm:$0xff] %vm454, -1e+30
        %481 = vst.msk [vmem:[#allocation3 + $0xd0] sm:$0xff] %vm454, -1e+30
        %482 = vst.msk [vmem:[#allocation3 + $0xd8] sm:$0xff] %vm454, -1e+30
        %483 = vst.msk [vmem:[#allocation3 + $0xe0] sm:$0xff] %vm454, -1e+30
        %484 = vst.msk [vmem:[#allocation3 + $0xe8] sm:$0xff] %vm454, -1e+30
        %485 = vst.msk [vmem:[#allocation3 + $0xf0] sm:$0xff] %vm454, -1e+30
        %486 = vst.msk [vmem:[#allocation3 + $0xf8] sm:$0xff] %vm454, -1e+30
        %487 = vst.msk [vmem:[#allocation4] sm:$0xff] %vm454, 0.0
        %488 = vst.msk [vmem:[#allocation4 + $0x8] sm:$0xff] %vm454, 0.0
        %489 = vst.msk [vmem:[#allocation4 + $0x10] sm:$0xff] %vm454, 0.0
        %490 = vst.msk [vmem:[#allocation4 + $0x18] sm:$0xff] %vm454, 0.0
        %491 = vst.msk [vmem:[#allocation4 + $0x20] sm:$0xff] %vm454, 0.0
        %492 = vst.msk [vmem:[#allocation4 + $0x28] sm:$0xff] %vm454, 0.0
        %493 = vst.msk [vmem:[#allocation4 + $0x30] sm:$0xff] %vm454, 0.0
        %494 = vst.msk [vmem:[#allocation4 + $0x38] sm:$0xff] %vm454, 0.0
        %495 = vst.msk [vmem:[#allocation4 + $0x40] sm:$0xff] %vm454, 0.0
        %496 = vst.msk [vmem:[#allocation4 + $0x48] sm:$0xff] %vm454, 0.0
        %497 = vst.msk [vmem:[#allocation4 + $0x50] sm:$0xff] %vm454, 0.0
        %498 = vst.msk [vmem:[#allocation4 + $0x58] sm:$0xff] %vm454, 0.0
        %499 = vst.msk [vmem:[#allocation4 + $0x60] sm:$0xff] %vm454, 0.0
        %500 = vst.msk [vmem:[#allocation4 + $0x68] sm:$0xff] %vm454, 0.0
        %501 = vst.msk [vmem:[#allocation4 + $0x70] sm:$0xff] %vm454, 0.0
        %502 = vst.msk [vmem:[#allocation4 + $0x78] sm:$0xff] %vm454, 0.0
        %503 = vst.msk [vmem:[#allocation4 + $0x80] sm:$0xff] %vm454, 0.0
        %504 = vst.msk [vmem:[#allocation4 + $0x88] sm:$0xff] %vm454, 0.0
        %505 = vst.msk [vmem:[#allocation4 + $0x90] sm:$0xff] %vm454, 0.0
        %506 = vst.msk [vmem:[#allocation4 + $0x98] sm:$0xff] %vm454, 0.0
        %507 = vst.msk [vmem:[#allocation4 + $0xa0] sm:$0xff] %vm454, 0.0
        %508 = vst.msk [vmem:[#allocation4 + $0xa8] sm:$0xff] %vm454, 0.0
        %509 = vst.msk [vmem:[#allocation4 + $0xb0] sm:$0xff] %vm454, 0.0
        %510 = vst.msk [vmem:[#allocation4 + $0xb8] sm:$0xff] %vm454, 0.0
        %511 = vst.msk [vmem:[#allocation4 + $0xc0] sm:$0xff] %vm454, 0.0
        %512 = vst.msk [vmem:[#allocation4 + $0xc8] sm:$0xff] %vm454, 0.0
        %513 = vst.msk [vmem:[#allocation4 + $0xd0] sm:$0xff] %vm454, 0.0
        %514 = vst.msk [vmem:[#allocation4 + $0xd8] sm:$0xff] %vm454, 0.0
        %515 = vst.msk [vmem:[#allocation4 + $0xe0] sm:$0xff] %vm454, 0.0
        %516 = vst.msk [vmem:[#allocation4 + $0xe8] sm:$0xff] %vm454, 0.0
        %517 = vst.msk [vmem:[#allocation4 + $0xf0] sm:$0xff] %vm454, 0.0
        %518 = vst.msk [vmem:[#allocation4 + $0xf8] sm:$0xff] %vm454, 0.0
        %vm519 = vcmask 523264
        %520 = vst.msk [vmem:[#allocation5] sm:$0xff] %vm519, 0.0
        %521 = vst.msk [vmem:[#allocation5 + $0x8] sm:$0xff] %vm519, 0.0
        %522 = vst.msk [vmem:[#allocation5 + $0x10] sm:$0xff] %vm519, 0.0
        %523 = vst.msk [vmem:[#allocation5 + $0x18] sm:$0xff] %vm519, 0.0
        %524 = vst.msk [vmem:[#allocation5 + $0x20] sm:$0xff] %vm519, 0.0
        %525 = vst.msk [vmem:[#allocation5 + $0x28] sm:$0xff] %vm519, 0.0
        %526 = vst.msk [vmem:[#allocation5 + $0x30] sm:$0xff] %vm519, 0.0
        %527 = vst.msk [vmem:[#allocation5 + $0x38] sm:$0xff] %vm519, 0.0
        %528 = vst.msk [vmem:[#allocation5 + $0x40] sm:$0xff] %vm519, 0.0
        %529 = vst.msk [vmem:[#allocation5 + $0x48] sm:$0xff] %vm519, 0.0
        %530 = vst.msk [vmem:[#allocation5 + $0x50] sm:$0xff] %vm519, 0.0
        %531 = vst.msk [vmem:[#allocation5 + $0x58] sm:$0xff] %vm519, 0.0
        %532 = vst.msk [vmem:[#allocation5 + $0x60] sm:$0xff] %vm519, 0.0
        %533 = vst.msk [vmem:[#allocation5 + $0x68] sm:$0xff] %vm519, 0.0
        %534 = vst.msk [vmem:[#allocation5 + $0x70] sm:$0xff] %vm519, 0.0
        %535 = vst.msk [vmem:[#allocation5 + $0x78] sm:$0xff] %vm519, 0.0
        %536 = vst.msk [vmem:[#allocation5 + $0x80] sm:$0xff] %vm519, 0.0
        %537 = vst.msk [vmem:[#allocation5 + $0x88] sm:$0xff] %vm519, 0.0
        %538 = vst.msk [vmem:[#allocation5 + $0x90] sm:$0xff] %vm519, 0.0
        %539 = vst.msk [vmem:[#allocation5 + $0x98] sm:$0xff] %vm519, 0.0
        %540 = vst.msk [vmem:[#allocation5 + $0xa0] sm:$0xff] %vm519, 0.0
        %541 = vst.msk [vmem:[#allocation5 + $0xa8] sm:$0xff] %vm519, 0.0
        %542 = vst.msk [vmem:[#allocation5 + $0xb0] sm:$0xff] %vm519, 0.0
        %543 = vst.msk [vmem:[#allocation5 + $0xb8] sm:$0xff] %vm519, 0.0
        %544 = vst.msk [vmem:[#allocation5 + $0xc0] sm:$0xff] %vm519, 0.0
        %545 = vst.msk [vmem:[#allocation5 + $0xc8] sm:$0xff] %vm519, 0.0
        %546 = vst.msk [vmem:[#allocation5 + $0xd0] sm:$0xff] %vm519, 0.0
        %547 = vst.msk [vmem:[#allocation5 + $0xd8] sm:$0xff] %vm519, 0.0
        %548 = vst.msk [vmem:[#allocation5 + $0xe0] sm:$0xff] %vm519, 0.0
        %549 = vst.msk [vmem:[#allocation5 + $0xe8] sm:$0xff] %vm519, 0.0
        %550 = vst.msk [vmem:[#allocation5 + $0xf0] sm:$0xff] %vm519, 0.0
        %551 = vst.msk [vmem:[#allocation5 + $0xf8] sm:$0xff] %vm519, 0.0
      $region36: #{tpu_custom_call.1} parent=31 // pred_fallthru
        _
      %v552 = vld [vmem:[#allocation2] sm:$0xf]
      %v553 = vld [vmem:[#allocation2 + $0x4] sm:$0xf]
      %v554 = vld [vmem:[#allocation2 + $0x8] sm:$0xf]
      %v555 = vld [vmem:[#allocation2 + $0xc] sm:$0xf]
      %v556 = vld [vmem:[#allocation2 + $0x10] sm:$0xf]
      %v557 = vld [vmem:[#allocation2 + $0x14] sm:$0xf]
      %v558 = vld [vmem:[#allocation2 + $0x18] sm:$0xf]
      %v559 = vld [vmem:[#allocation2 + $0x1c] sm:$0xf]
      %v560 = vld [vmem:[#allocation2 + $0x20] sm:$0xf]
      %v561 = vld [vmem:[#allocation2 + $0x24] sm:$0xf]
      %v562 = vld [vmem:[#allocation2 + $0x28] sm:$0xf]
      %v563 = vld [vmem:[#allocation2 + $0x2c] sm:$0xf]
      %v564 = vld [vmem:[#allocation2 + $0x30] sm:$0xf]
      %v565 = vld [vmem:[#allocation2 + $0x34] sm:$0xf]
      %v566 = vld [vmem:[#allocation2 + $0x38] sm:$0xf]
      %v567 = vld [vmem:[#allocation2 + $0x3c] sm:$0xf]
      %v568 = vld [vmem:[#allocation2 + $0x40] sm:$0xf]
      %v569 = vld [vmem:[#allocation2 + $0x44] sm:$0xf]
      %v570 = vld [vmem:[#allocation2 + $0x48] sm:$0xf]
      %v571 = vld [vmem:[#allocation2 + $0x4c] sm:$0xf]
      %v572 = vld [vmem:[#allocation2 + $0x50] sm:$0xf]
      %v573 = vld [vmem:[#allocation2 + $0x54] sm:$0xf]
      %v574 = vld [vmem:[#allocation2 + $0x58] sm:$0xf]
      %v575 = vld [vmem:[#allocation2 + $0x5c] sm:$0xf]
      %v576 = vld [vmem:[#allocation2 + $0x60] sm:$0xf]
      %v577 = vld [vmem:[#allocation2 + $0x64] sm:$0xf]
      %v578 = vld [vmem:[#allocation2 + $0x68] sm:$0xf]
      %v579 = vld [vmem:[#allocation2 + $0x6c] sm:$0xf]
      %v580 = vld [vmem:[#allocation2 + $0x70] sm:$0xf]
      %v581 = vld [vmem:[#allocation2 + $0x74] sm:$0xf]
      %v582 = vld [vmem:[#allocation2 + $0x78] sm:$0xf]
      %v583 = vld [vmem:[#allocation2 + $0x7c] sm:$0xf]
      %v584 = vld [vmem:[%s267] sm:$0xf]
      %v585 = vld [vmem:[%s267 + $0x4] sm:$0xf]
      %v586 = vld [vmem:[%s267 + $0x8] sm:$0xf]
      %v587 = vld [vmem:[%s267 + $0xc] sm:$0xf]
      %v588 = vld [vmem:[%s267 + $0x10] sm:$0xf]
      %v589 = vld [vmem:[%s267 + $0x14] sm:$0xf]
      %v590 = vld [vmem:[%s267 + $0x18] sm:$0xf]
      %v591 = vld [vmem:[%s267 + $0x1c] sm:$0xf]
      %v592 = vld [vmem:[%s267 + $0x20] sm:$0xf]
      %v593 = vld [vmem:[%s267 + $0x24] sm:$0xf]
      %v594 = vld [vmem:[%s267 + $0x28] sm:$0xf]
      %v595 = vld [vmem:[%s267 + $0x2c] sm:$0xf]
      %v596 = vld [vmem:[%s267 + $0x30] sm:$0xf]
      %v597 = vld [vmem:[%s267 + $0x34] sm:$0xf]
      %v598 = vld [vmem:[%s267 + $0x38] sm:$0xf]
      %v599 = vld [vmem:[%s267 + $0x3c] sm:$0xf]
      %v600 = vld [vmem:[%s267 + $0x40] sm:$0xf]
      %v601 = vld [vmem:[%s267 + $0x44] sm:$0xf]
      %v602 = vld [vmem:[%s267 + $0x48] sm:$0xf]
      %v603 = vld [vmem:[%s267 + $0x4c] sm:$0xf]
      %v604 = vld [vmem:[%s267 + $0x50] sm:$0xf]
      %v605 = vld [vmem:[%s267 + $0x54] sm:$0xf]
      %v606 = vld [vmem:[%s267 + $0x58] sm:$0xf]
      %v607 = vld [vmem:[%s267 + $0x5c] sm:$0xf]
      %v608 = vld [vmem:[%s267 + $0x60] sm:$0xf]
      %v609 = vld [vmem:[%s267 + $0x64] sm:$0xf]
      %v610 = vld [vmem:[%s267 + $0x68] sm:$0xf]
      %v611 = vld [vmem:[%s267 + $0x6c] sm:$0xf]
      %v612 = vld [vmem:[%s267 + $0x70] sm:$0xf]
      %v613 = vld [vmem:[%s267 + $0x74] sm:$0xf]
      %v614 = vld [vmem:[%s267 + $0x78] sm:$0xf]
      %v615 = vld [vmem:[%s267 + $0x7c] sm:$0xf]
      %v648 = vunpack.c.l.b16 %v552
      %v649 = vunpack.c.l.b16 %v553
      %v650 = vunpack.c.l.b16 %v554
      %v651 = vunpack.c.l.b16 %v555
      %v652 = vunpack.c.l.b16 %v556
      %v653 = vunpack.c.l.b16 %v557
      %v654 = vunpack.c.l.b16 %v558
      %v655 = vunpack.c.l.b16 %v559
      %v656 = vunpack.c.l.b16 %v560
      %v657 = vunpack.c.l.b16 %v561
      %v658 = vunpack.c.l.b16 %v562
      %v659 = vunpack.c.l.b16 %v563
      %v660 = vunpack.c.l.b16 %v564
      %v661 = vunpack.c.l.b16 %v565
      %v662 = vunpack.c.l.b16 %v566
      %v663 = vunpack.c.l.b16 %v567
      %v664 = vunpack.c.l.b16 %v568
      %v665 = vunpack.c.l.b16 %v569
      %v666 = vunpack.c.l.b16 %v570
      %v667 = vunpack.c.l.b16 %v571
      %v668 = vunpack.c.l.b16 %v572
      %v669 = vunpack.c.l.b16 %v573
      %v670 = vunpack.c.l.b16 %v574
      %v671 = vunpack.c.l.b16 %v575
      %v672 = vunpack.c.l.b16 %v576
      %v673 = vunpack.c.l.b16 %v577
      %v674 = vunpack.c.l.b16 %v578
      %v675 = vunpack.c.l.b16 %v579
      %v676 = vunpack.c.l.b16 %v580
      %v677 = vunpack.c.l.b16 %v581
      %v678 = vunpack.c.l.b16 %v582
      %v679 = vunpack.c.l.b16 %v583
      %v680 = vpack.c.b16 %v649, %v648
      %v681 = vpack.c.b16 %v651, %v650
      %v682 = vpack.c.b16 %v653, %v652
      %v683 = vpack.c.b16 %v655, %v654
      %v684 = vpack.c.b16 %v657, %v656
      %v685 = vpack.c.b16 %v659, %v658
      %v686 = vpack.c.b16 %v661, %v660
      %v687 = vpack.c.b16 %v663, %v662
      %v688 = vpack.c.b16 %v665, %v664
      %v689 = vpack.c.b16 %v667, %v666
      %v690 = vpack.c.b16 %v669, %v668
      %v691 = vpack.c.b16 %v671, %v670
      %v692 = vpack.c.b16 %v673, %v672
      %v693 = vpack.c.b16 %v675, %v674
      %v694 = vpack.c.b16 %v677, %v676
      %v695 = vpack.c.b16 %v679, %v678
      %v728 = vunpack.c.l.b16 %v584
      %v729 = vunpack.c.l.b16 %v585
      %v730 = vunpack.c.l.b16 %v586
      %v731 = vunpack.c.l.b16 %v587
      %v732 = vunpack.c.l.b16 %v588
      %v733 = vunpack.c.l.b16 %v589
      %v734 = vunpack.c.l.b16 %v590
      %v735 = vunpack.c.l.b16 %v591
      %v736 = vunpack.c.l.b16 %v592
      %v737 = vunpack.c.l.b16 %v593
      %v738 = vunpack.c.l.b16 %v594
      %v739 = vunpack.c.l.b16 %v595
      %v740 = vunpack.c.l.b16 %v596
      %v741 = vunpack.c.l.b16 %v597
      %v742 = vunpack.c.l.b16 %v598
      %v743 = vunpack.c.l.b16 %v599
      %v744 = vunpack.c.l.b16 %v600
      %v745 = vunpack.c.l.b16 %v601
      %v746 = vunpack.c.l.b16 %v602
      %v747 = vunpack.c.l.b16 %v603
      %v748 = vunpack.c.l.b16 %v604
      %v749 = vunpack.c.l.b16 %v605
      %v750 = vunpack.c.l.b16 %v606
      %v751 = vunpack.c.l.b16 %v607
      %v752 = vunpack.c.l.b16 %v608
      %v753 = vunpack.c.l.b16 %v609
      %v754 = vunpack.c.l.b16 %v610
      %v755 = vunpack.c.l.b16 %v611
      %v756 = vunpack.c.l.b16 %v612
      %v757 = vunpack.c.l.b16 %v613
      %v758 = vunpack.c.l.b16 %v614
      %v759 = vunpack.c.l.b16 %v615
      %v760 = vpack.c.b16 %v729, %v728
      %v761 = vpack.c.b16 %v731, %v730
      %v762 = vpack.c.b16 %v733, %v732
      %v763 = vpack.c.b16 %v735, %v734
      %v764 = vpack.c.b16 %v737, %v736
      %v765 = vpack.c.b16 %v739, %v738
      %v766 = vpack.c.b16 %v741, %v740
      %v767 = vpack.c.b16 %v743, %v742
      %v768 = vpack.c.b16 %v745, %v744
      %v769 = vpack.c.b16 %v747, %v746
      %v770 = vpack.c.b16 %v749, %v748
      %v771 = vpack.c.b16 %v751, %v750
      %v772 = vpack.c.b16 %v753, %v752
      %v773 = vpack.c.b16 %v755, %v754
      %v774 = vpack.c.b16 %v757, %v756
      %v775 = vpack.c.b16 %v759, %v758
      %vm776 = vcmask 523264
      %v778 = vsel %vm776, %v680, 0
      %v781 = vsel %vm776, %v681, 0
      %v784 = vsel %vm776, %v682, 0
      %v787 = vsel %vm776, %v683, 0
      %v790 = vsel %vm776, %v684, 0
      %v793 = vsel %vm776, %v685, 0
      %v796 = vsel %vm776, %v686, 0
      %v799 = vsel %vm776, %v687, 0
      %v802 = vsel %vm776, %v688, 0
      %v805 = vsel %vm776, %v689, 0
      %v808 = vsel %vm776, %v690, 0
      %v811 = vsel %vm776, %v691, 0
      %v814 = vsel %vm776, %v692, 0
      %v817 = vsel %vm776, %v693, 0
      %v820 = vsel %vm776, %v694, 0
      %v823 = vsel %vm776, %v695, 0
      %v826 = vsel %vm776, %v760, 0
      %v829 = vsel %vm776, %v761, 0
      %v832 = vsel %vm776, %v762, 0
      %v835 = vsel %vm776, %v763, 0
      %v838 = vsel %vm776, %v764, 0
      %v841 = vsel %vm776, %v765, 0
      %v844 = vsel %vm776, %v766, 0
      %v847 = vsel %vm776, %v767, 0
      %v850 = vsel %vm776, %v768, 0
      %v853 = vsel %vm776, %v769, 0
      %v856 = vsel %vm776, %v770, 0
      %v859 = vsel %vm776, %v771, 0
      %v862 = vsel %vm776, %v772, 0
      %v865 = vsel %vm776, %v773, 0
      %v868 = vsel %vm776, %v774, 0
      %v871 = vsel %vm776, %v775, 0
      %873 = vmatpush.bf16.xpose.msra.mxu0 %v847
      %874 = vmatpush.bf16.xpose.msra.mxu0 %v844
      %875 = vmatpush.bf16.xpose.msra.mxu0 %v841
      %876 = vmatpush.bf16.xpose.msra.mxu0 %v838
      %877 = vmatpush.bf16.xpose.msra.mxu0 %v835
      %878 = vmatpush.bf16.xpose.msra.mxu0 %v832
      %879 = vmatpush.bf16.xpose.msra.mxu0 %v829
      %880 = vmatpush.bf16.xpose.msra.mxu0 %v826
      %881 = vmatmul.bf16.gmra.mxu0 %v778
      %v882 = vpop.f32.mrf.mxu0
      %v883 = vadd.f32 0.0, %v882
      %v884 = vpop.f32.mrf.mxu0
      %v885 = vadd.f32 0.0, %v884
      %886 = vmatmul.bf16.gmra.mxu0 %v781
      %v887 = vpop.f32.mrf.mxu0
      %v888 = vadd.f32 0.0, %v887
      %v889 = vpop.f32.mrf.mxu0
      %v890 = vadd.f32 0.0, %v889
      %891 = vmatmul.bf16.gmra.mxu0 %v784
      %v892 = vpop.f32.mrf.mxu0
      %v893 = vadd.f32 0.0, %v892
      %v894 = vpop.f32.mrf.mxu0
      %v895 = vadd.f32 0.0, %v894
      %896 = vmatmul.bf16.gmra.mxu0 %v787
      %v897 = vpop.f32.mrf.mxu0
      %v898 = vadd.f32 0.0, %v897
      %v899 = vpop.f32.mrf.mxu0
      %v900 = vadd.f32 0.0, %v899
      %901 = vmatmul.bf16.gmra.mxu0 %v790
      %v902 = vpop.f32.mrf.mxu0
      %v903 = vadd.f32 0.0, %v902
      %v904 = vpop.f32.mrf.mxu0
      %v905 = vadd.f32 0.0, %v904
      %906 = vmatmul.bf16.gmra.mxu0 %v793
      %v907 = vpop.f32.mrf.mxu0
      %v908 = vadd.f32 0.0, %v907
      %v909 = vpop.f32.mrf.mxu0
      %v910 = vadd.f32 0.0, %v909
      %911 = vmatmul.bf16.gmra.mxu0 %v796
      %v912 = vpop.f32.mrf.mxu0
      %v913 = vadd.f32 0.0, %v912
      %v914 = vpop.f32.mrf.mxu0
      %v915 = vadd.f32 0.0, %v914
      %916 = vmatmul.bf16.gmra.mxu0 %v799
      %v917 = vpop.f32.mrf.mxu0
      %v918 = vadd.f32 0.0, %v917
      %v919 = vpop.f32.mrf.mxu0
      %v920 = vadd.f32 0.0, %v919
      %921 = vmatmul.bf16.gmra.mxu0 %v802
      %v922 = vpop.f32.mrf.mxu0
      %v923 = vadd.f32 0.0, %v922
      %v924 = vpop.f32.mrf.mxu0
      %v925 = vadd.f32 0.0, %v924
      %926 = vmatmul.bf16.gmra.mxu0 %v805
      %v927 = vpop.f32.mrf.mxu0
      %v928 = vadd.f32 0.0, %v927
      %v929 = vpop.f32.mrf.mxu0
      %v930 = vadd.f32 0.0, %v929
      %931 = vmatmul.bf16.gmra.mxu0 %v808
      %v932 = vpop.f32.mrf.mxu0
      %v933 = vadd.f32 0.0, %v932
      %v934 = vpop.f32.mrf.mxu0
      %v935 = vadd.f32 0.0, %v934
      %936 = vmatmul.bf16.gmra.mxu0 %v811
      %v937 = vpop.f32.mrf.mxu0
      %v938 = vadd.f32 0.0, %v937
      %v939 = vpop.f32.mrf.mxu0
      %v940 = vadd.f32 0.0, %v939
      %941 = vmatmul.bf16.gmra.mxu0 %v814
      %v942 = vpop.f32.mrf.mxu0
      %v943 = vadd.f32 0.0, %v942
      %v944 = vpop.f32.mrf.mxu0
      %v945 = vadd.f32 0.0, %v944
      %946 = vmatmul.bf16.gmra.mxu0 %v817
      %v947 = vpop.f32.mrf.mxu0
      %v948 = vadd.f32 0.0, %v947
      %v949 = vpop.f32.mrf.mxu0
      %v950 = vadd.f32 0.0, %v949
      %951 = vmatmul.bf16.gmra.mxu0 %v820
      %v952 = vpop.f32.mrf.mxu0
      %v953 = vadd.f32 0.0, %v952
      %v954 = vpop.f32.mrf.mxu0
      %v955 = vadd.f32 0.0, %v954
      %956 = vmatmul.bf16.gmra.mxu0 %v823
      %v957 = vpop.f32.mrf.mxu0
      %v958 = vadd.f32 0.0, %v957
      %v959 = vpop.f32.mrf.mxu0
      %v960 = vadd.f32 0.0, %v959
      %961 = vdwg.mxu0
      %962 = vmatpush.bf16.xpose.msra.mxu0 %v871
      %963 = vmatpush.bf16.xpose.msra.mxu0 %v868
      %964 = vmatpush.bf16.xpose.msra.mxu0 %v865
      %965 = vmatpush.bf16.xpose.msra.mxu0 %v862
      %966 = vmatpush.bf16.xpose.msra.mxu0 %v859
      %967 = vmatpush.bf16.xpose.msra.mxu0 %v856
      %968 = vmatpush.bf16.xpose.msra.mxu0 %v853
      %969 = vmatpush.bf16.xpose.msra.mxu0 %v850
      %970 = vmatmul.bf16.gmra.mxu0 %v778
      %v971 = vpop.f32.mrf.mxu0
      %v972 = vadd.f32 0.0, %v971
      %v973 = vpop.f32.mrf.mxu0
      %v974 = vadd.f32 0.0, %v973
      %975 = vmatmul.bf16.gmra.mxu0 %v781
      %v976 = vpop.f32.mrf.mxu0
      %v977 = vadd.f32 0.0, %v976
      %v978 = vpop.f32.mrf.mxu0
      %v979 = vadd.f32 0.0, %v978
      %980 = vmatmul.bf16.gmra.mxu0 %v784
      %v981 = vpop.f32.mrf.mxu0
      %v982 = vadd.f32 0.0, %v981
      %v983 = vpop.f32.mrf.mxu0
      %v984 = vadd.f32 0.0, %v983
      %985 = vmatmul.bf16.gmra.mxu0 %v787
      %v986 = vpop.f32.mrf.mxu0
      %v987 = vadd.f32 0.0, %v986
      %v988 = vpop.f32.mrf.mxu0
      %v989 = vadd.f32 0.0, %v988
      %990 = vmatmul.bf16.gmra.mxu0 %v790
      %v991 = vpop.f32.mrf.mxu0
      %v992 = vadd.f32 0.0, %v991
      %v993 = vpop.f32.mrf.mxu0
      %v994 = vadd.f32 0.0, %v993
      %995 = vmatmul.bf16.gmra.mxu0 %v793
      %v996 = vpop.f32.mrf.mxu0
      %v997 = vadd.f32 0.0, %v996
      %v998 = vpop.f32.mrf.mxu0
      %v999 = vadd.f32 0.0, %v998
      %1000 = vmatmul.bf16.gmra.mxu0 %v796
      %v1001 = vpop.f32.mrf.mxu0
      %v1002 = vadd.f32 0.0, %v1001
      %v1003 = vpop.f32.mrf.mxu0
      %v1004 = vadd.f32 0.0, %v1003
      %1005 = vmatmul.bf16.gmra.mxu0 %v799
      %v1006 = vpop.f32.mrf.mxu0
      %v1007 = vadd.f32 0.0, %v1006
      %v1008 = vpop.f32.mrf.mxu0
      %v1009 = vadd.f32 0.0, %v1008
      %1010 = vmatmul.bf16.gmra.mxu0 %v802
      %v1011 = vpop.f32.mrf.mxu0
      %v1012 = vadd.f32 0.0, %v1011
      %v1013 = vpop.f32.mrf.mxu0
      %v1014 = vadd.f32 0.0, %v1013
      %1015 = vmatmul.bf16.gmra.mxu0 %v805
      %v1016 = vpop.f32.mrf.mxu0
      %v1017 = vadd.f32 0.0, %v1016
      %v1018 = vpop.f32.mrf.mxu0
      %v1019 = vadd.f32 0.0, %v1018
      %1020 = vmatmul.bf16.gmra.mxu0 %v808
      %v1021 = vpop.f32.mrf.mxu0
      %v1022 = vadd.f32 0.0, %v1021
      %v1023 = vpop.f32.mrf.mxu0
      %v1024 = vadd.f32 0.0, %v1023
      %1025 = vmatmul.bf16.gmra.mxu0 %v811
      %v1026 = vpop.f32.mrf.mxu0
      %v1027 = vadd.f32 0.0, %v1026
      %v1028 = vpop.f32.mrf.mxu0
      %v1029 = vadd.f32 0.0, %v1028
      %1030 = vmatmul.bf16.gmra.mxu0 %v814
      %v1031 = vpop.f32.mrf.mxu0
      %v1032 = vadd.f32 0.0, %v1031
      %v1033 = vpop.f32.mrf.mxu0
      %v1034 = vadd.f32 0.0, %v1033
      %1035 = vmatmul.bf16.gmra.mxu0 %v817
      %v1036 = vpop.f32.mrf.mxu0
      %v1037 = vadd.f32 0.0, %v1036
      %v1038 = vpop.f32.mrf.mxu0
      %v1039 = vadd.f32 0.0, %v1038
      %1040 = vmatmul.bf16.gmra.mxu0 %v820
      %v1041 = vpop.f32.mrf.mxu0
      %v1042 = vadd.f32 0.0, %v1041
      %v1043 = vpop.f32.mrf.mxu0
      %v1044 = vadd.f32 0.0, %v1043
      %1045 = vmatmul.bf16.gmra.mxu0 %v823
      %v1046 = vpop.f32.mrf.mxu0
      %v1047 = vadd.f32 0.0, %v1046
      %v1048 = vpop.f32.mrf.mxu0
      %v1049 = vadd.f32 0.0, %v1048
      %1050 = vdwg.mxu0
      %v1051 = vld [vmem:[#allocation3] sm:$0xff]
      %v1052 = vld [vmem:[#allocation3 + $0x8] sm:$0xff]
      %v1053 = vld [vmem:[#allocation3 + $0x10] sm:$0xff]
      %v1054 = vld [vmem:[#allocation3 + $0x18] sm:$0xff]
      %v1055 = vld [vmem:[#allocation3 + $0x20] sm:$0xff]
      %v1056 = vld [vmem:[#allocation3 + $0x28] sm:$0xff]
      %v1057 = vld [vmem:[#allocation3 + $0x30] sm:$0xff]
      %v1058 = vld [vmem:[#allocation3 + $0x38] sm:$0xff]
      %v1059 = vld [vmem:[#allocation3 + $0x40] sm:$0xff]
      %v1060 = vld [vmem:[#allocation3 + $0x48] sm:$0xff]
      %v1061 = vld [vmem:[#allocation3 + $0x50] sm:$0xff]
      %v1062 = vld [vmem:[#allocation3 + $0x58] sm:$0xff]
      %v1063 = vld [vmem:[#allocation3 + $0x60] sm:$0xff]
      %v1064 = vld [vmem:[#allocation3 + $0x68] sm:$0xff]
      %v1065 = vld [vmem:[#allocation3 + $0x70] sm:$0xff]
      %v1066 = vld [vmem:[#allocation3 + $0x78] sm:$0xff]
      %v1067 = vld [vmem:[#allocation3 + $0x80] sm:$0xff]
      %v1068 = vld [vmem:[#allocation3 + $0x88] sm:$0xff]
      %v1069 = vld [vmem:[#allocation3 + $0x90] sm:$0xff]
      %v1070 = vld [vmem:[#allocation3 + $0x98] sm:$0xff]
      %v1071 = vld [vmem:[#allocation3 + $0xa0] sm:$0xff]
      %v1072 = vld [vmem:[#allocation3 + $0xa8] sm:$0xff]
      %v1073 = vld [vmem:[#allocation3 + $0xb0] sm:$0xff]
      %v1074 = vld [vmem:[#allocation3 + $0xb8] sm:$0xff]
      %v1075 = vld [vmem:[#allocation3 + $0xc0] sm:$0xff]
      %v1076 = vld [vmem:[#allocation3 + $0xc8] sm:$0xff]
      %v1077 = vld [vmem:[#allocation3 + $0xd0] sm:$0xff]
      %v1078 = vld [vmem:[#allocation3 + $0xd8] sm:$0xff]
      %v1079 = vld [vmem:[#allocation3 + $0xe0] sm:$0xff]
      %v1080 = vld [vmem:[#allocation3 + $0xe8] sm:$0xff]
      %v1081 = vld [vmem:[#allocation3 + $0xf0] sm:$0xff]
      %v1082 = vld [vmem:[#allocation3 + $0xf8] sm:$0xff]
      %v1083 = vmax.f32 %v883, %v972
      %1084 = vmax.xlane.f32.xlu0 %v1083
      %v1085 = vpop.xlane.xlu0 %1084
      %v1086 = vmax.f32 %v885, %v974
      %1087 = vmax.xlane.f32.xlu0 %v1086
      %v1088 = vpop.xlane.xlu0 %1087
      %v1089 = vmax.f32 %v888, %v977
      %1090 = vmax.xlane.f32.xlu0 %v1089
      %v1091 = vpop.xlane.xlu0 %1090
      %v1092 = vmax.f32 %v890, %v979
      %1093 = vmax.xlane.f32.xlu0 %v1092
      %v1094 = vpop.xlane.xlu0 %1093
      %v1095 = vmax.f32 %v893, %v982
      %1096 = vmax.xlane.f32.xlu0 %v1095
      %v1097 = vpop.xlane.xlu0 %1096
      %v1098 = vmax.f32 %v895, %v984
      %1099 = vmax.xlane.f32.xlu0 %v1098
      %v1100 = vpop.xlane.xlu0 %1099
      %v1101 = vmax.f32 %v898, %v987
      %1102 = vmax.xlane.f32.xlu0 %v1101
      %v1103 = vpop.xlane.xlu0 %1102
      %v1104 = vmax.f32 %v900, %v989
      %1105 = vmax.xlane.f32.xlu0 %v1104
      %v1106 = vpop.xlane.xlu0 %1105
      %v1107 = vmax.f32 %v903, %v992
      %1108 = vmax.xlane.f32.xlu0 %v1107
      %v1109 = vpop.xlane.xlu0 %1108
      %v1110 = vmax.f32 %v905, %v994
      %1111 = vmax.xlane.f32.xlu0 %v1110
      %v1112 = vpop.xlane.xlu0 %1111
      %v1113 = vmax.f32 %v908, %v997
      %1114 = vmax.xlane.f32.xlu0 %v1113
      %v1115 = vpop.xlane.xlu0 %1114
      %v1116 = vmax.f32 %v910, %v999
      %1117 = vmax.xlane.f32.xlu0 %v1116
      %v1118 = vpop.xlane.xlu0 %1117
      %v1119 = vmax.f32 %v913, %v1002
      %1120 = vmax.xlane.f32.xlu0 %v1119
      %v1121 = vpop.xlane.xlu0 %1120
      %v1122 = vmax.f32 %v915, %v1004
      %1123 = vmax.xlane.f32.xlu0 %v1122
      %v1124 = vpop.xlane.xlu0 %1123
      %v1125 = vmax.f32 %v918, %v1007
      %1126 = vmax.xlane.f32.xlu0 %v1125
      %v1127 = vpop.xlane.xlu0 %1126
      %v1128 = vmax.f32 %v920, %v1009
      %1129 = vmax.xlane.f32.xlu0 %v1128
      %v1130 = vpop.xlane.xlu0 %1129
      %v1131 = vmax.f32 %v923, %v1012
      %1132 = vmax.xlane.f32.xlu0 %v1131
      %v1133 = vpop.xlane.xlu0 %1132
      %v1134 = vmax.f32 %v925, %v1014
      %1135 = vmax.xlane.f32.xlu0 %v1134
      %v1136 = vpop.xlane.xlu0 %1135
      %v1137 = vmax.f32 %v928, %v1017
      %1138 = vmax.xlane.f32.xlu0 %v1137
      %v1139 = vpop.xlane.xlu0 %1138
      %v1140 = vmax.f32 %v930, %v1019
      %1141 = vmax.xlane.f32.xlu0 %v1140
      %v1142 = vpop.xlane.xlu0 %1141
      %v1143 = vmax.f32 %v933, %v1022
      %1144 = vmax.xlane.f32.xlu0 %v1143
      %v1145 = vpop.xlane.xlu0 %1144
      %v1146 = vmax.f32 %v935, %v1024
      %1147 = vmax.xlane.f32.xlu0 %v1146
      %v1148 = vpop.xlane.xlu0 %1147
      %v1149 = vmax.f32 %v938, %v1027
      %1150 = vmax.xlane.f32.xlu0 %v1149
      %v1151 = vpop.xlane.xlu0 %1150
      %v1152 = vmax.f32 %v940, %v1029
      %1153 = vmax.xlane.f32.xlu0 %v1152
      %v1154 = vpop.xlane.xlu0 %1153
      %v1155 = vmax.f32 %v943, %v1032
      %1156 = vmax.xlane.f32.xlu0 %v1155
      %v1157 = vpop.xlane.xlu0 %1156
      %v1158 = vmax.f32 %v945, %v1034
      %1159 = vmax.xlane.f32.xlu0 %v1158
      %v1160 = vpop.xlane.xlu0 %1159
      %v1161 = vmax.f32 %v948, %v1037
      %1162 = vmax.xlane.f32.xlu0 %v1161
      %v1163 = vpop.xlane.xlu0 %1162
      %v1164 = vmax.f32 %v950, %v1039
      %1165 = vmax.xlane.f32.xlu0 %v1164
      %v1166 = vpop.xlane.xlu0 %1165
      %v1167 = vmax.f32 %v953, %v1042
      %1168 = vmax.xlane.f32.xlu0 %v1167
      %v1169 = vpop.xlane.xlu0 %1168
      %v1170 = vmax.f32 %v955, %v1044
      %1171 = vmax.xlane.f32.xlu0 %v1170
      %v1172 = vpop.xlane.xlu0 %1171
      %v1173 = vmax.f32 %v958, %v1047
      %1174 = vmax.xlane.f32.xlu0 %v1173
      %v1175 = vpop.xlane.xlu0 %1174
      %v1176 = vmax.f32 %v960, %v1049
      %1177 = vmax.xlane.f32.xlu0 %v1176
      %v1178 = vpop.xlane.xlu0 %1177
      %v1179 = vmax.f32 %v1051, %v1085
      %v1180 = vmax.f32 %v1052, %v1088
      %v1181 = vmax.f32 %v1053, %v1091
      %v1182 = vmax.f32 %v1054, %v1094
      %v1183 = vmax.f32 %v1055, %v1097
      %v1184 = vmax.f32 %v1056, %v1100
      %v1185 = vmax.f32 %v1057, %v1103
      %v1186 = vmax.f32 %v1058, %v1106
      %v1187 = vmax.f32 %v1059, %v1109
      %v1188 = vmax.f32 %v1060, %v1112
      %v1189 = vmax.f32 %v1061, %v1115
      %v1190 = vmax.f32 %v1062, %v1118
      %v1191 = vmax.f32 %v1063, %v1121
      %v1192 = vmax.f32 %v1064, %v1124
      %v1193 = vmax.f32 %v1065, %v1127
      %v1194 = vmax.f32 %v1066, %v1130
      %v1195 = vmax.f32 %v1067, %v1133
      %v1196 = vmax.f32 %v1068, %v1136
      %v1197 = vmax.f32 %v1069, %v1139
      %v1198 = vmax.f32 %v1070, %v1142
      %v1199 = vmax.f32 %v1071, %v1145
      %v1200 = vmax.f32 %v1072, %v1148
      %v1201 = vmax.f32 %v1073, %v1151
      %v1202 = vmax.f32 %v1074, %v1154
      %v1203 = vmax.f32 %v1075, %v1157
      %v1204 = vmax.f32 %v1076, %v1160
      %v1205 = vmax.f32 %v1077, %v1163
      %v1206 = vmax.f32 %v1078, %v1166
      %v1207 = vmax.f32 %v1079, %v1169
      %v1208 = vmax.f32 %v1080, %v1172
      %v1209 = vmax.f32 %v1081, %v1175
      %v1210 = vmax.f32 %v1082, %v1178
      %v1211 = vsub.f32 %v1051, %v1179
      %v1212 = vsub.f32 %v1052, %v1180
      %v1213 = vsub.f32 %v1053, %v1181
      %v1214 = vsub.f32 %v1054, %v1182
      %v1215 = vsub.f32 %v1055, %v1183
      %v1216 = vsub.f32 %v1056, %v1184
      %v1217 = vsub.f32 %v1057, %v1185
      %v1218 = vsub.f32 %v1058, %v1186
      %v1219 = vsub.f32 %v1059, %v1187
      %v1220 = vsub.f32 %v1060, %v1188
      %v1221 = vsub.f32 %v1061, %v1189
      %v1222 = vsub.f32 %v1062, %v1190
      %v1223 = vsub.f32 %v1063, %v1191
      %v1224 = vsub.f32 %v1064, %v1192
      %v1225 = vsub.f32 %v1065, %v1193
      %v1226 = vsub.f32 %v1066, %v1194
      %v1227 = vsub.f32 %v1067, %v1195
      %v1228 = vsub.f32 %v1068, %v1196
      %v1229 = vsub.f32 %v1069, %v1197
      %v1230 = vsub.f32 %v1070, %v1198
      %v1231 = vsub.f32 %v1071, %v1199
      %v1232 = vsub.f32 %v1072, %v1200
      %v1233 = vsub.f32 %v1073, %v1201
      %v1234 = vsub.f32 %v1074, %v1202
      %v1235 = vsub.f32 %v1075, %v1203
      %v1236 = vsub.f32 %v1076, %v1204
      %v1237 = vsub.f32 %v1077, %v1205
      %v1238 = vsub.f32 %v1078, %v1206
      %v1239 = vsub.f32 %v1079, %v1207
      %v1240 = vsub.f32 %v1080, %v1208
      %v1241 = vsub.f32 %v1081, %v1209
      %v1242 = vsub.f32 %v1082, %v1210
      %v1243 = vmul.f32 %v1211, 1.442695
      %v1244 = vpow.pop %v1243
      %v1245 = vmul.f32 %v1212, 1.442695
      %v1246 = vpow.pop %v1245
      %v1247 = vmul.f32 %v1213, 1.442695
      %v1248 = vpow.pop %v1247
      %v1249 = vmul.f32 %v1214, 1.442695
      %v1250 = vpow.pop %v1249
      %v1251 = vmul.f32 %v1215, 1.442695
      %v1252 = vpow.pop %v1251
      %v1253 = vmul.f32 %v1216, 1.442695
      %v1254 = vpow.pop %v1253
      %v1255 = vmul.f32 %v1217, 1.442695
      %v1256 = vpow.pop %v1255
      %v1257 = vmul.f32 %v1218, 1.442695
      %v1258 = vpow.pop %v1257
      %v1259 = vmul.f32 %v1219, 1.442695
      %v1260 = vpow.pop %v1259
      %v1261 = vmul.f32 %v1220, 1.442695
      %v1262 = vpow.pop %v1261
      %v1263 = vmul.f32 %v1221, 1.442695
      %v1264 = vpow.pop %v1263
      %v1265 = vmul.f32 %v1222, 1.442695
      %v1266 = vpow.pop %v1265
      %v1267 = vmul.f32 %v1223, 1.442695
      %v1268 = vpow.pop %v1267
      %v1269 = vmul.f32 %v1224, 1.442695
      %v1270 = vpow.pop %v1269
      %v1271 = vmul.f32 %v1225, 1.442695
      %v1272 = vpow.pop %v1271
      %v1273 = vmul.f32 %v1226, 1.442695
      %v1274 = vpow.pop %v1273
      %v1275 = vmul.f32 %v1227, 1.442695
      %v1276 = vpow.pop %v1275
      %v1277 = vmul.f32 %v1228, 1.442695
      %v1278 = vpow.pop %v1277
      %v1279 = vmul.f32 %v1229, 1.442695
      %v1280 = vpow.pop %v1279
      %v1281 = vmul.f32 %v1230, 1.442695
      %v1282 = vpow.pop %v1281
      %v1283 = vmul.f32 %v1231, 1.442695
      %v1284 = vpow.pop %v1283
      %v1285 = vmul.f32 %v1232, 1.442695
      %v1286 = vpow.pop %v1285
      %v1287 = vmul.f32 %v1233, 1.442695
      %v1288 = vpow.pop %v1287
      %v1289 = vmul.f32 %v1234, 1.442695
      %v1290 = vpow.pop %v1289
      %v1291 = vmul.f32 %v1235, 1.442695
      %v1292 = vpow.pop %v1291
      %v1293 = vmul.f32 %v1236, 1.442695
      %v1294 = vpow.pop %v1293
      %v1295 = vmul.f32 %v1237, 1.442695
      %v1296 = vpow.pop %v1295
      %v1297 = vmul.f32 %v1238, 1.442695
      %v1298 = vpow.pop %v1297
      %v1299 = vmul.f32 %v1239, 1.442695
      %v1300 = vpow.pop %v1299
      %v1301 = vmul.f32 %v1240, 1.442695
      %v1302 = vpow.pop %v1301
      %v1303 = vmul.f32 %v1241, 1.442695
      %v1304 = vpow.pop %v1303
      %v1305 = vmul.f32 %v1242, 1.442695
      %v1306 = vpow.pop %v1305
      %1308 = vset.pattern.permute.xlu0 0
      %1309 = vperm.xlu0 %1308, %v1179
      %v1310 = vpop.permute.xlu0 %1309
      %1313 = vset.pattern.permute.xlu0 0
      %1314 = vperm.xlu0 %1313, %v1180
      %v1315 = vpop.permute.xlu0 %1314
      %1318 = vset.pattern.permute.xlu0 0
      %1319 = vperm.xlu0 %1318, %v1181
      %v1320 = vpop.permute.xlu0 %1319
      %1323 = vset.pattern.permute.xlu0 0
      %1324 = vperm.xlu0 %1323, %v1182
      %v1325 = vpop.permute.xlu0 %1324
      %1328 = vset.pattern.permute.xlu0 0
      %1329 = vperm.xlu0 %1328, %v1183
      %v1330 = vpop.permute.xlu0 %1329
      %1333 = vset.pattern.permute.xlu0 0
      %1334 = vperm.xlu0 %1333, %v1184
      %v1335 = vpop.permute.xlu0 %1334
      %1338 = vset.pattern.permute.xlu0 0
      %1339 = vperm.xlu0 %1338, %v1185
      %v1340 = vpop.permute.xlu0 %1339
      %1343 = vset.pattern.permute.xlu0 0
      %1344 = vperm.xlu0 %1343, %v1186
      %v1345 = vpop.permute.xlu0 %1344
      %1348 = vset.pattern.permute.xlu0 0
      %1349 = vperm.xlu0 %1348, %v1187
      %v1350 = vpop.permute.xlu0 %1349
      %1353 = vset.pattern.permute.xlu0 0
      %1354 = vperm.xlu0 %1353, %v1188
      %v1355 = vpop.permute.xlu0 %1354
      %1358 = vset.pattern.permute.xlu0 0
      %1359 = vperm.xlu0 %1358, %v1189
      %v1360 = vpop.permute.xlu0 %1359
      %1363 = vset.pattern.permute.xlu0 0
      %1364 = vperm.xlu0 %1363, %v1190
      %v1365 = vpop.permute.xlu0 %1364
      %1368 = vset.pattern.permute.xlu0 0
      %1369 = vperm.xlu0 %1368, %v1191
      %v1370 = vpop.permute.xlu0 %1369
      %1373 = vset.pattern.permute.xlu0 0
      %1374 = vperm.xlu0 %1373, %v1192
      %v1375 = vpop.permute.xlu0 %1374
      %1378 = vset.pattern.permute.xlu0 0
      %1379 = vperm.xlu0 %1378, %v1193
      %v1380 = vpop.permute.xlu0 %1379
      %1383 = vset.pattern.permute.xlu0 0
      %1384 = vperm.xlu0 %1383, %v1194
      %v1385 = vpop.permute.xlu0 %1384
      %1388 = vset.pattern.permute.xlu0 0
      %1389 = vperm.xlu0 %1388, %v1195
      %v1390 = vpop.permute.xlu0 %1389
      %1393 = vset.pattern.permute.xlu0 0
      %1394 = vperm.xlu0 %1393, %v1196
      %v1395 = vpop.permute.xlu0 %1394
      %1398 = vset.pattern.permute.xlu0 0
      %1399 = vperm.xlu0 %1398, %v1197
      %v1400 = vpop.permute.xlu0 %1399
      %1403 = vset.pattern.permute.xlu0 0
      %1404 = vperm.xlu0 %1403, %v1198
      %v1405 = vpop.permute.xlu0 %1404
      %1408 = vset.pattern.permute.xlu0 0
      %1409 = vperm.xlu0 %1408, %v1199
      %v1410 = vpop.permute.xlu0 %1409
      %1413 = vset.pattern.permute.xlu0 0
      %1414 = vperm.xlu0 %1413, %v1200
      %v1415 = vpop.permute.xlu0 %1414
      %1418 = vset.pattern.permute.xlu0 0
      %1419 = vperm.xlu0 %1418, %v1201
      %v1420 = vpop.permute.xlu0 %1419
      %1423 = vset.pattern.permute.xlu0 0
      %1424 = vperm.xlu0 %1423, %v1202
      %v1425 = vpop.permute.xlu0 %1424
      %1428 = vset.pattern.permute.xlu0 0
      %1429 = vperm.xlu0 %1428, %v1203
      %v1430 = vpop.permute.xlu0 %1429
      %1433 = vset.pattern.permute.xlu0 0
      %1434 = vperm.xlu0 %1433, %v1204
      %v1435 = vpop.permute.xlu0 %1434
      %1438 = vset.pattern.permute.xlu0 0
      %1439 = vperm.xlu0 %1438, %v1205
      %v1440 = vpop.permute.xlu0 %1439
      %1443 = vset.pattern.permute.xlu0 0
      %1444 = vperm.xlu0 %1443, %v1206
      %v1445 = vpop.permute.xlu0 %1444
      %1448 = vset.pattern.permute.xlu0 0
      %1449 = vperm.xlu0 %1448, %v1207
      %v1450 = vpop.permute.xlu0 %1449
      %1453 = vset.pattern.permute.xlu0 0
      %1454 = vperm.xlu0 %1453, %v1208
      %v1455 = vpop.permute.xlu0 %1454
      %1458 = vset.pattern.permute.xlu0 0
      %1459 = vperm.xlu0 %1458, %v1209
      %v1460 = vpop.permute.xlu0 %1459
      %1463 = vset.pattern.permute.xlu0 0
      %1464 = vperm.xlu0 %1463, %v1210
      %v1465 = vpop.permute.xlu0 %1464
      %v1467 = vsub.f32 %v883, %v1310
      %v1468 = vsub.f32 %v972, %v1310
      %v1469 = vsub.f32 %v885, %v1315
      %v1470 = vsub.f32 %v974, %v1315
      %v1471 = vsub.f32 %v888, %v1320
      %v1472 = vsub.f32 %v977, %v1320
      %v1473 = vsub.f32 %v890, %v1325
      %v1474 = vsub.f32 %v979, %v1325
      %v1475 = vsub.f32 %v893, %v1330
      %v1476 = vsub.f32 %v982, %v1330
      %v1477 = vsub.f32 %v895, %v1335
      %v1478 = vsub.f32 %v984, %v1335
      %v1479 = vsub.f32 %v898, %v1340
      %v1480 = vsub.f32 %v987, %v1340
      %v1481 = vsub.f32 %v900, %v1345
      %v1482 = vsub.f32 %v989, %v1345
      %v1483 = vsub.f32 %v903, %v1350
      %v1484 = vsub.f32 %v992, %v1350
      %v1485 = vsub.f32 %v905, %v1355
      %v1486 = vsub.f32 %v994, %v1355
      %v1487 = vsub.f32 %v908, %v1360
      %v1488 = vsub.f32 %v997, %v1360
      %v1489 = vsub.f32 %v910, %v1365
      %v1490 = vsub.f32 %v999, %v1365
      %v1491 = vsub.f32 %v913, %v1370
      %v1492 = vsub.f32 %v1002, %v1370
      %v1493 = vsub.f32 %v915, %v1375
      %v1494 = vsub.f32 %v1004, %v1375
      %v1495 = vsub.f32 %v918, %v1380
      %v1496 = vsub.f32 %v1007, %v1380
      %v1497 = vsub.f32 %v920, %v1385
      %v1498 = vsub.f32 %v1009, %v1385
      %v1499 = vsub.f32 %v923, %v1390
      %v1500 = vsub.f32 %v1012, %v1390
      %v1501 = vsub.f32 %v925, %v1395
      %v1502 = vsub.f32 %v1014, %v1395
      %v1503 = vsub.f32 %v928, %v1400
      %v1504 = vsub.f32 %v1017, %v1400
      %v1505 = vsub.f32 %v930, %v1405
      %v1506 = vsub.f32 %v1019, %v1405
      %v1507 = vsub.f32 %v933, %v1410
      %v1508 = vsub.f32 %v1022, %v1410
      %v1509 = vsub.f32 %v935, %v1415
      %v1510 = vsub.f32 %v1024, %v1415
      %v1511 = vsub.f32 %v938, %v1420
      %v1512 = vsub.f32 %v1027, %v1420
      %v1513 = vsub.f32 %v940, %v1425
      %v1514 = vsub.f32 %v1029, %v1425
      %v1515 = vsub.f32 %v943, %v1430
      %v1516 = vsub.f32 %v1032, %v1430
      %v1517 = vsub.f32 %v945, %v1435
      %v1518 = vsub.f32 %v1034, %v1435
      %v1519 = vsub.f32 %v948, %v1440
      %v1520 = vsub.f32 %v1037, %v1440
      %v1521 = vsub.f32 %v950, %v1445
      %v1522 = vsub.f32 %v1039, %v1445
      %v1523 = vsub.f32 %v953, %v1450
      %v1524 = vsub.f32 %v1042, %v1450
      %v1525 = vsub.f32 %v955, %v1455
      %v1526 = vsub.f32 %v1044, %v1455
      %v1527 = vsub.f32 %v958, %v1460
      %v1528 = vsub.f32 %v1047, %v1460
      %v1529 = vsub.f32 %v960, %v1465
      %v1530 = vsub.f32 %v1049, %v1465
      %v1531 = vmul.f32 %v1467, 1.442695
      %v1532 = vpow.pop %v1531
      %v1533 = vmul.f32 %v1468, 1.442695
      %v1534 = vpow.pop %v1533
      %v1535 = vmul.f32 %v1469, 1.442695
      %v1536 = vpow.pop %v1535
      %v1537 = vmul.f32 %v1470, 1.442695
      %v1538 = vpow.pop %v1537
      %v1539 = vmul.f32 %v1471, 1.442695
      %v1540 = vpow.pop %v1539
      %v1541 = vmul.f32 %v1472, 1.442695
      %v1542 = vpow.pop %v1541
      %v1543 = vmul.f32 %v1473, 1.442695
      %v1544 = vpow.pop %v1543
      %v1545 = vmul.f32 %v1474, 1.442695
      %v1546 = vpow.pop %v1545
      %v1547 = vmul.f32 %v1475, 1.442695
      %v1548 = vpow.pop %v1547
      %v1549 = vmul.f32 %v1476, 1.442695
      %v1550 = vpow.pop %v1549
      %v1551 = vmul.f32 %v1477, 1.442695
      %v1552 = vpow.pop %v1551
      %v1553 = vmul.f32 %v1478, 1.442695
      %v1554 = vpow.pop %v1553
      %v1555 = vmul.f32 %v1479, 1.442695
      %v1556 = vpow.pop %v1555
      %v1557 = vmul.f32 %v1480, 1.442695
      %v1558 = vpow.pop %v1557
      %v1559 = vmul.f32 %v1481, 1.442695
      %v1560 = vpow.pop %v1559
      %v1561 = vmul.f32 %v1482, 1.442695
      %v1562 = vpow.pop %v1561
      %v1563 = vmul.f32 %v1483, 1.442695
      %v1564 = vpow.pop %v1563
      %v1565 = vmul.f32 %v1484, 1.442695
      %v1566 = vpow.pop %v1565
      %v1567 = vmul.f32 %v1485, 1.442695
      %v1568 = vpow.pop %v1567
      %v1569 = vmul.f32 %v1486, 1.442695
      %v1570 = vpow.pop %v1569
      %v1571 = vmul.f32 %v1487, 1.442695
      %v1572 = vpow.pop %v1571
      %v1573 = vmul.f32 %v1488, 1.442695
      %v1574 = vpow.pop %v1573
      %v1575 = vmul.f32 %v1489, 1.442695
      %v1576 = vpow.pop %v1575
      %v1577 = vmul.f32 %v1490, 1.442695
      %v1578 = vpow.pop %v1577
      %v1579 = vmul.f32 %v1491, 1.442695
      %v1580 = vpow.pop %v1579
      %v1581 = vmul.f32 %v1492, 1.442695
      %v1582 = vpow.pop %v1581
      %v1583 = vmul.f32 %v1493, 1.442695
      %v1584 = vpow.pop %v1583
      %v1585 = vmul.f32 %v1494, 1.442695
      %v1586 = vpow.pop %v1585
      %v1587 = vmul.f32 %v1495, 1.442695
      %v1588 = vpow.pop %v1587
      %v1589 = vmul.f32 %v1496, 1.442695
      %v1590 = vpow.pop %v1589
      %v1591 = vmul.f32 %v1497, 1.442695
      %v1592 = vpow.pop %v1591
      %v1593 = vmul.f32 %v1498, 1.442695
      %v1594 = vpow.pop %v1593
      %v1595 = vmul.f32 %v1499, 1.442695
      %v1596 = vpow.pop %v1595
      %v1597 = vmul.f32 %v1500, 1.442695
      %v1598 = vpow.pop %v1597
      %v1599 = vmul.f32 %v1501, 1.442695
      %v1600 = vpow.pop %v1599
      %v1601 = vmul.f32 %v1502, 1.442695
      %v1602 = vpow.pop %v1601
      %v1603 = vmul.f32 %v1503, 1.442695
      %v1604 = vpow.pop %v1603
      %v1605 = vmul.f32 %v1504, 1.442695
      %v1606 = vpow.pop %v1605
      %v1607 = vmul.f32 %v1505, 1.442695
      %v1608 = vpow.pop %v1607
      %v1609 = vmul.f32 %v1506, 1.442695
      %v1610 = vpow.pop %v1609
      %v1611 = vmul.f32 %v1507, 1.442695
      %v1612 = vpow.pop %v1611
      %v1613 = vmul.f32 %v1508, 1.442695
      %v1614 = vpow.pop %v1613
      %v1615 = vmul.f32 %v1509, 1.442695
      %v1616 = vpow.pop %v1615
      %v1617 = vmul.f32 %v1510, 1.442695
      %v1618 = vpow.pop %v1617
      %v1619 = vmul.f32 %v1511, 1.442695
      %v1620 = vpow.pop %v1619
      %v1621 = vmul.f32 %v1512, 1.442695
      %v1622 = vpow.pop %v1621
      %v1623 = vmul.f32 %v1513, 1.442695
      %v1624 = vpow.pop %v1623
      %v1625 = vmul.f32 %v1514, 1.442695
      %v1626 = vpow.pop %v1625
      %v1627 = vmul.f32 %v1515, 1.442695
      %v1628 = vpow.pop %v1627
      %v1629 = vmul.f32 %v1516, 1.442695
      %v1630 = vpow.pop %v1629
      %v1631 = vmul.f32 %v1517, 1.442695
      %v1632 = vpow.pop %v1631
      %v1633 = vmul.f32 %v1518, 1.442695
      %v1634 = vpow.pop %v1633
      %v1635 = vmul.f32 %v1519, 1.442695
      %v1636 = vpow.pop %v1635
      %v1637 = vmul.f32 %v1520, 1.442695
      %v1638 = vpow.pop %v1637
      %v1639 = vmul.f32 %v1521, 1.442695
      %v1640 = vpow.pop %v1639
      %v1641 = vmul.f32 %v1522, 1.442695
      %v1642 = vpow.pop %v1641
      %v1643 = vmul.f32 %v1523, 1.442695
      %v1644 = vpow.pop %v1643
      %v1645 = vmul.f32 %v1524, 1.442695
      %v1646 = vpow.pop %v1645
      %v1647 = vmul.f32 %v1525, 1.442695
      %v1648 = vpow.pop %v1647
      %v1649 = vmul.f32 %v1526, 1.442695
      %v1650 = vpow.pop %v1649
      %v1651 = vmul.f32 %v1527, 1.442695
      %v1652 = vpow.pop %v1651
      %v1653 = vmul.f32 %v1528, 1.442695
      %v1654 = vpow.pop %v1653
      %v1655 = vmul.f32 %v1529, 1.442695
      %v1656 = vpow.pop %v1655
      %v1657 = vmul.f32 %v1530, 1.442695
      %v1658 = vpow.pop %v1657
      %v1659 = vld [vmem:[#allocation4] sm:$0xff]
      %v1660 = vld [vmem:[#allocation4 + $0x8] sm:$0xff]
      %v1661 = vld [vmem:[#allocation4 + $0x10] sm:$0xff]
      %v1662 = vld [vmem:[#allocation4 + $0x18] sm:$0xff]
      %v1663 = vld [vmem:[#allocation4 + $0x20] sm:$0xff]
      %v1664 = vld [vmem:[#allocation4 + $0x28] sm:$0xff]
      %v1665 = vld [vmem:[#allocation4 + $0x30] sm:$0xff]
      %v1666 = vld [vmem:[#allocation4 + $0x38] sm:$0xff]
      %v1667 = vld [vmem:[#allocation4 + $0x40] sm:$0xff]
      %v1668 = vld [vmem:[#allocation4 + $0x48] sm:$0xff]
      %v1669 = vld [vmem:[#allocation4 + $0x50] sm:$0xff]
      %v1670 = vld [vmem:[#allocation4 + $0x58] sm:$0xff]
      %v1671 = vld [vmem:[#allocation4 + $0x60] sm:$0xff]
      %v1672 = vld [vmem:[#allocation4 + $0x68] sm:$0xff]
      %v1673 = vld [vmem:[#allocation4 + $0x70] sm:$0xff]
      %v1674 = vld [vmem:[#allocation4 + $0x78] sm:$0xff]
      %v1675 = vld [vmem:[#allocation4 + $0x80] sm:$0xff]
      %v1676 = vld [vmem:[#allocation4 + $0x88] sm:$0xff]
      %v1677 = vld [vmem:[#allocation4 + $0x90] sm:$0xff]
      %v1678 = vld [vmem:[#allocation4 + $0x98] sm:$0xff]
      %v1679 = vld [vmem:[#allocation4 + $0xa0] sm:$0xff]
      %v1680 = vld [vmem:[#allocation4 + $0xa8] sm:$0xff]
      %v1681 = vld [vmem:[#allocation4 + $0xb0] sm:$0xff]
      %v1682 = vld [vmem:[#allocation4 + $0xb8] sm:$0xff]
      %v1683 = vld [vmem:[#allocation4 + $0xc0] sm:$0xff]
      %v1684 = vld [vmem:[#allocation4 + $0xc8] sm:$0xff]
      %v1685 = vld [vmem:[#allocation4 + $0xd0] sm:$0xff]
      %v1686 = vld [vmem:[#allocation4 + $0xd8] sm:$0xff]
      %v1687 = vld [vmem:[#allocation4 + $0xe0] sm:$0xff]
      %v1688 = vld [vmem:[#allocation4 + $0xe8] sm:$0xff]
      %v1689 = vld [vmem:[#allocation4 + $0xf0] sm:$0xff]
      %v1690 = vld [vmem:[#allocation4 + $0xf8] sm:$0xff]
      %v1691 = vmul.f32 %v1244, %v1659
      %v1692 = vmul.f32 %v1246, %v1660
      %v1693 = vmul.f32 %v1248, %v1661
      %v1694 = vmul.f32 %v1250, %v1662
      %v1695 = vmul.f32 %v1252, %v1663
      %v1696 = vmul.f32 %v1254, %v1664
      %v1697 = vmul.f32 %v1256, %v1665
      %v1698 = vmul.f32 %v1258, %v1666
      %v1699 = vmul.f32 %v1260, %v1667
      %v1700 = vmul.f32 %v1262, %v1668
      %v1701 = vmul.f32 %v1264, %v1669
      %v1702 = vmul.f32 %v1266, %v1670
      %v1703 = vmul.f32 %v1268, %v1671
      %v1704 = vmul.f32 %v1270, %v1672
      %v1705 = vmul.f32 %v1272, %v1673
      %v1706 = vmul.f32 %v1274, %v1674
      %v1707 = vmul.f32 %v1276, %v1675
      %v1708 = vmul.f32 %v1278, %v1676
      %v1709 = vmul.f32 %v1280, %v1677
      %v1710 = vmul.f32 %v1282, %v1678
      %v1711 = vmul.f32 %v1284, %v1679
      %v1712 = vmul.f32 %v1286, %v1680
      %v1713 = vmul.f32 %v1288, %v1681
      %v1714 = vmul.f32 %v1290, %v1682
      %v1715 = vmul.f32 %v1292, %v1683
      %v1716 = vmul.f32 %v1294, %v1684
      %v1717 = vmul.f32 %v1296, %v1685
      %v1718 = vmul.f32 %v1298, %v1686
      %v1719 = vmul.f32 %v1300, %v1687
      %v1720 = vmul.f32 %v1302, %v1688
      %v1721 = vmul.f32 %v1304, %v1689
      %v1722 = vmul.f32 %v1306, %v1690
      %v1723 = vadd.f32 %v1532, %v1534
      %1724 = vadd.xlane.f32.xlu0 %v1723
      %v1725 = vpop.xlane.xlu0 %1724
      %v1726 = vadd.f32 %v1536, %v1538
      %1727 = vadd.xlane.f32.xlu0 %v1726
      %v1728 = vpop.xlane.xlu0 %1727
      %v1729 = vadd.f32 %v1540, %v1542
      %1730 = vadd.xlane.f32.xlu0 %v1729
      %v1731 = vpop.xlane.xlu0 %1730
      %v1732 = vadd.f32 %v1544, %v1546
      %1733 = vadd.xlane.f32.xlu0 %v1732
      %v1734 = vpop.xlane.xlu0 %1733
      %v1735 = vadd.f32 %v1548, %v1550
      %1736 = vadd.xlane.f32.xlu0 %v1735
      %v1737 = vpop.xlane.xlu0 %1736
      %v1738 = vadd.f32 %v1552, %v1554
      %1739 = vadd.xlane.f32.xlu0 %v1738
      %v1740 = vpop.xlane.xlu0 %1739
      %v1741 = vadd.f32 %v1556, %v1558
      %1742 = vadd.xlane.f32.xlu0 %v1741
      %v1743 = vpop.xlane.xlu0 %1742
      %v1744 = vadd.f32 %v1560, %v1562
      %1745 = vadd.xlane.f32.xlu0 %v1744
      %v1746 = vpop.xlane.xlu0 %1745
      %v1747 = vadd.f32 %v1564, %v1566
      %1748 = vadd.xlane.f32.xlu0 %v1747
      %v1749 = vpop.xlane.xlu0 %1748
      %v1750 = vadd.f32 %v1568, %v1570
      %1751 = vadd.xlane.f32.xlu0 %v1750
      %v1752 = vpop.xlane.xlu0 %1751
      %v1753 = vadd.f32 %v1572, %v1574
      %1754 = vadd.xlane.f32.xlu0 %v1753
      %v1755 = vpop.xlane.xlu0 %1754
      %v1756 = vadd.f32 %v1576, %v1578
      %1757 = vadd.xlane.f32.xlu0 %v1756
      %v1758 = vpop.xlane.xlu0 %1757
      %v1759 = vadd.f32 %v1580, %v1582
      %1760 = vadd.xlane.f32.xlu0 %v1759
      %v1761 = vpop.xlane.xlu0 %1760
      %v1762 = vadd.f32 %v1584, %v1586
      %1763 = vadd.xlane.f32.xlu0 %v1762
      %v1764 = vpop.xlane.xlu0 %1763
      %v1765 = vadd.f32 %v1588, %v1590
      %1766 = vadd.xlane.f32.xlu0 %v1765
      %v1767 = vpop.xlane.xlu0 %1766
      %v1768 = vadd.f32 %v1592, %v1594
      %1769 = vadd.xlane.f32.xlu0 %v1768
      %v1770 = vpop.xlane.xlu0 %1769
      %v1771 = vadd.f32 %v1596, %v1598
      %1772 = vadd.xlane.f32.xlu0 %v1771
      %v1773 = vpop.xlane.xlu0 %1772
      %v1774 = vadd.f32 %v1600, %v1602
      %1775 = vadd.xlane.f32.xlu0 %v1774
      %v1776 = vpop.xlane.xlu0 %1775
      %v1777 = vadd.f32 %v1604, %v1606
      %1778 = vadd.xlane.f32.xlu0 %v1777
      %v1779 = vpop.xlane.xlu0 %1778
      %v1780 = vadd.f32 %v1608, %v1610
      %1781 = vadd.xlane.f32.xlu0 %v1780
      %v1782 = vpop.xlane.xlu0 %1781
      %v1783 = vadd.f32 %v1612, %v1614
      %1784 = vadd.xlane.f32.xlu0 %v1783
      %v1785 = vpop.xlane.xlu0 %1784
      %v1786 = vadd.f32 %v1616, %v1618
      %1787 = vadd.xlane.f32.xlu0 %v1786
      %v1788 = vpop.xlane.xlu0 %1787
      %v1789 = vadd.f32 %v1620, %v1622
      %1790 = vadd.xlane.f32.xlu0 %v1789
      %v1791 = vpop.xlane.xlu0 %1790
      %v1792 = vadd.f32 %v1624, %v1626
      %1793 = vadd.xlane.f32.xlu0 %v1792
      %v1794 = vpop.xlane.xlu0 %1793
      %v1795 = vadd.f32 %v1628, %v1630
      %1796 = vadd.xlane.f32.xlu0 %v1795
      %v1797 = vpop.xlane.xlu0 %1796
      %v1798 = vadd.f32 %v1632, %v1634
      %1799 = vadd.xlane.f32.xlu0 %v1798
      %v1800 = vpop.xlane.xlu0 %1799
      %v1801 = vadd.f32 %v1636, %v1638
      %1802 = vadd.xlane.f32.xlu0 %v1801
      %v1803 = vpop.xlane.xlu0 %1802
      %v1804 = vadd.f32 %v1640, %v1642
      %1805 = vadd.xlane.f32.xlu0 %v1804
      %v1806 = vpop.xlane.xlu0 %1805
      %v1807 = vadd.f32 %v1644, %v1646
      %1808 = vadd.xlane.f32.xlu0 %v1807
      %v1809 = vpop.xlane.xlu0 %1808
      %v1810 = vadd.f32 %v1648, %v1650
      %1811 = vadd.xlane.f32.xlu0 %v1810
      %v1812 = vpop.xlane.xlu0 %1811
      %v1813 = vadd.f32 %v1652, %v1654
      %1814 = vadd.xlane.f32.xlu0 %v1813
      %v1815 = vpop.xlane.xlu0 %1814
      %v1816 = vadd.f32 %v1656, %v1658
      %1817 = vadd.xlane.f32.xlu0 %v1816
      %v1818 = vpop.xlane.xlu0 %1817
      %v1819 = vadd.f32 %v1691, %v1725
      %v1820 = vadd.f32 %v1692, %v1728
      %v1821 = vadd.f32 %v1693, %v1731
      %v1822 = vadd.f32 %v1694, %v1734
      %v1823 = vadd.f32 %v1695, %v1737
      %v1824 = vadd.f32 %v1696, %v1740
      %v1825 = vadd.f32 %v1697, %v1743
      %v1826 = vadd.f32 %v1698, %v1746
      %v1827 = vadd.f32 %v1699, %v1749
      %v1828 = vadd.f32 %v1700, %v1752
      %v1829 = vadd.f32 %v1701, %v1755
      %v1830 = vadd.f32 %v1702, %v1758
      %v1831 = vadd.f32 %v1703, %v1761
      %v1832 = vadd.f32 %v1704, %v1764
      %v1833 = vadd.f32 %v1705, %v1767
      %v1834 = vadd.f32 %v1706, %v1770
      %v1835 = vadd.f32 %v1707, %v1773
      %v1836 = vadd.f32 %v1708, %v1776
      %v1837 = vadd.f32 %v1709, %v1779
      %v1838 = vadd.f32 %v1710, %v1782
      %v1839 = vadd.f32 %v1711, %v1785
      %v1840 = vadd.f32 %v1712, %v1788
      %v1841 = vadd.f32 %v1713, %v1791
      %v1842 = vadd.f32 %v1714, %v1794
      %v1843 = vadd.f32 %v1715, %v1797
      %v1844 = vadd.f32 %v1716, %v1800
      %v1845 = vadd.f32 %v1717, %v1803
      %v1846 = vadd.f32 %v1718, %v1806
      %v1847 = vadd.f32 %v1719, %v1809
      %v1848 = vadd.f32 %v1720, %v1812
      %v1849 = vadd.f32 %v1721, %v1815
      %v1850 = vadd.f32 %v1722, %v1818
      %vm1851 = vcmask 7168
      %1852 = vst.msk [vmem:[#allocation4] sm:$0xff] %vm1851, %v1819
      %1853 = vst.msk [vmem:[#allocation4 + $0x8] sm:$0xff] %vm1851, %v1820
      %1854 = vst.msk [vmem:[#allocation4 + $0x10] sm:$0xff] %vm1851, %v1821
      %1855 = vst.msk [vmem:[#allocation4 + $0x18] sm:$0xff] %vm1851, %v1822
      %1856 = vst.msk [vmem:[#allocation4 + $0x20] sm:$0xff] %vm1851, %v1823
      %1857 = vst.msk [vmem:[#allocation4 + $0x28] sm:$0xff] %vm1851, %v1824
      %1858 = vst.msk [vmem:[#allocation4 + $0x30] sm:$0xff] %vm1851, %v1825
      %1859 = vst.msk [vmem:[#allocation4 + $0x38] sm:$0xff] %vm1851, %v1826
      %1860 = vst.msk [vmem:[#allocation4 + $0x40] sm:$0xff] %vm1851, %v1827
      %1861 = vst.msk [vmem:[#allocation4 + $0x48] sm:$0xff] %vm1851, %v1828
      %1862 = vst.msk [vmem:[#allocation4 + $0x50] sm:$0xff] %vm1851, %v1829
      %1863 = vst.msk [vmem:[#allocation4 + $0x58] sm:$0xff] %vm1851, %v1830
      %1864 = vst.msk [vmem:[#allocation4 + $0x60] sm:$0xff] %vm1851, %v1831
      %1865 = vst.msk [vmem:[#allocation4 + $0x68] sm:$0xff] %vm1851, %v1832
      %1866 = vst.msk [vmem:[#allocation4 + $0x70] sm:$0xff] %vm1851, %v1833
      %1867 = vst.msk [vmem:[#allocation4 + $0x78] sm:$0xff] %vm1851, %v1834
      %1868 = vst.msk [vmem:[#allocation4 + $0x80] sm:$0xff] %vm1851, %v1835
      %1869 = vst.msk [vmem:[#allocation4 + $0x88] sm:$0xff] %vm1851, %v1836
      %1870 = vst.msk [vmem:[#allocation4 + $0x90] sm:$0xff] %vm1851, %v1837
      %1871 = vst.msk [vmem:[#allocation4 + $0x98] sm:$0xff] %vm1851, %v1838
      %1872 = vst.msk [vmem:[#allocation4 + $0xa0] sm:$0xff] %vm1851, %v1839
      %1873 = vst.msk [vmem:[#allocation4 + $0xa8] sm:$0xff] %vm1851, %v1840
      %1874 = vst.msk [vmem:[#allocation4 + $0xb0] sm:$0xff] %vm1851, %v1841
      %1875 = vst.msk [vmem:[#allocation4 + $0xb8] sm:$0xff] %vm1851, %v1842
      %1876 = vst.msk [vmem:[#allocation4 + $0xc0] sm:$0xff] %vm1851, %v1843
      %1877 = vst.msk [vmem:[#allocation4 + $0xc8] sm:$0xff] %vm1851, %v1844
      %1878 = vst.msk [vmem:[#allocation4 + $0xd0] sm:$0xff] %vm1851, %v1845
      %1879 = vst.msk [vmem:[#allocation4 + $0xd8] sm:$0xff] %vm1851, %v1846
      %1880 = vst.msk [vmem:[#allocation4 + $0xe0] sm:$0xff] %vm1851, %v1847
      %1881 = vst.msk [vmem:[#allocation4 + $0xe8] sm:$0xff] %vm1851, %v1848
      %1882 = vst.msk [vmem:[#allocation4 + $0xf0] sm:$0xff] %vm1851, %v1849
      %1883 = vst.msk [vmem:[#allocation4 + $0xf8] sm:$0xff] %vm1851, %v1850
      %v1884 = vld [vmem:[#allocation5] sm:$0xff]
      %v1885 = vld [vmem:[#allocation5 + $0x8] sm:$0xff]
      %v1886 = vld [vmem:[#allocation5 + $0x10] sm:$0xff]
      %v1887 = vld [vmem:[#allocation5 + $0x18] sm:$0xff]
      %v1888 = vld [vmem:[#allocation5 + $0x20] sm:$0xff]
      %v1889 = vld [vmem:[#allocation5 + $0x28] sm:$0xff]
      %v1890 = vld [vmem:[#allocation5 + $0x30] sm:$0xff]
      %v1891 = vld [vmem:[#allocation5 + $0x38] sm:$0xff]
      %v1892 = vld [vmem:[#allocation5 + $0x40] sm:$0xff]
      %v1893 = vld [vmem:[#allocation5 + $0x48] sm:$0xff]
      %v1894 = vld [vmem:[#allocation5 + $0x50] sm:$0xff]
      %v1895 = vld [vmem:[#allocation5 + $0x58] sm:$0xff]
      %v1896 = vld [vmem:[#allocation5 + $0x60] sm:$0xff]
      %v1897 = vld [vmem:[#allocation5 + $0x68] sm:$0xff]
      %v1898 = vld [vmem:[#allocation5 + $0x70] sm:$0xff]
      %v1899 = vld [vmem:[#allocation5 + $0x78] sm:$0xff]
      %v1900 = vld [vmem:[#allocation5 + $0x80] sm:$0xff]
      %v1901 = vld [vmem:[#allocation5 + $0x88] sm:$0xff]
      %v1902 = vld [vmem:[#allocation5 + $0x90] sm:$0xff]
      %v1903 = vld [vmem:[#allocation5 + $0x98] sm:$0xff]
      %v1904 = vld [vmem:[#allocation5 + $0xa0] sm:$0xff]
      %v1905 = vld [vmem:[#allocation5 + $0xa8] sm:$0xff]
      %v1906 = vld [vmem:[#allocation5 + $0xb0] sm:$0xff]
      %v1907 = vld [vmem:[#allocation5 + $0xb8] sm:$0xff]
      %v1908 = vld [vmem:[#allocation5 + $0xc0] sm:$0xff]
      %v1909 = vld [vmem:[#allocation5 + $0xc8] sm:$0xff]
      %v1910 = vld [vmem:[#allocation5 + $0xd0] sm:$0xff]
      %v1911 = vld [vmem:[#allocation5 + $0xd8] sm:$0xff]
      %v1912 = vld [vmem:[#allocation5 + $0xe0] sm:$0xff]
      %v1913 = vld [vmem:[#allocation5 + $0xe8] sm:$0xff]
      %v1914 = vld [vmem:[#allocation5 + $0xf0] sm:$0xff]
      %v1915 = vld [vmem:[#allocation5 + $0xf8] sm:$0xff]
      %1917 = vset.pattern.permute.xlu0 0
      %1918 = vperm.xlu0 %1917, %v1244
      %v1919 = vpop.permute.xlu0 %1918
      %1922 = vset.pattern.permute.xlu0 0
      %1923 = vperm.xlu0 %1922, %v1246
      %v1924 = vpop.permute.xlu0 %1923
      %1927 = vset.pattern.permute.xlu0 0
      %1928 = vperm.xlu0 %1927, %v1248
      %v1929 = vpop.permute.xlu0 %1928
      %1932 = vset.pattern.permute.xlu0 0
      %1933 = vperm.xlu0 %1932, %v1250
      %v1934 = vpop.permute.xlu0 %1933
      %1937 = vset.pattern.permute.xlu0 0
      %1938 = vperm.xlu0 %1937, %v1252
      %v1939 = vpop.permute.xlu0 %1938
      %1942 = vset.pattern.permute.xlu0 0
      %1943 = vperm.xlu0 %1942, %v1254
      %v1944 = vpop.permute.xlu0 %1943
      %1947 = vset.pattern.permute.xlu0 0
      %1948 = vperm.xlu0 %1947, %v1256
      %v1949 = vpop.permute.xlu0 %1948
      %1952 = vset.pattern.permute.xlu0 0
      %1953 = vperm.xlu0 %1952, %v1258
      %v1954 = vpop.permute.xlu0 %1953
      %1957 = vset.pattern.permute.xlu0 0
      %1958 = vperm.xlu0 %1957, %v1260
      %v1959 = vpop.permute.xlu0 %1958
      %1962 = vset.pattern.permute.xlu0 0
      %1963 = vperm.xlu0 %1962, %v1262
      %v1964 = vpop.permute.xlu0 %1963
      %1967 = vset.pattern.permute.xlu0 0
      %1968 = vperm.xlu0 %1967, %v1264
      %v1969 = vpop.permute.xlu0 %1968
      %1972 = vset.pattern.permute.xlu0 0
      %1973 = vperm.xlu0 %1972, %v1266
      %v1974 = vpop.permute.xlu0 %1973
      %1977 = vset.pattern.permute.xlu0 0
      %1978 = vperm.xlu0 %1977, %v1268
      %v1979 = vpop.permute.xlu0 %1978
      %1982 = vset.pattern.permute.xlu0 0
      %1983 = vperm.xlu0 %1982, %v1270
      %v1984 = vpop.permute.xlu0 %1983
      %1987 = vset.pattern.permute.xlu0 0
      %1988 = vperm.xlu0 %1987, %v1272
      %v1989 = vpop.permute.xlu0 %1988
      %1992 = vset.pattern.permute.xlu0 0
      %1993 = vperm.xlu0 %1992, %v1274
      %v1994 = vpop.permute.xlu0 %1993
      %1997 = vset.pattern.permute.xlu0 0
      %1998 = vperm.xlu0 %1997, %v1276
      %v1999 = vpop.permute.xlu0 %1998
      %2002 = vset.pattern.permute.xlu0 0
      %2003 = vperm.xlu0 %2002, %v1278
      %v2004 = vpop.permute.xlu0 %2003
      %2007 = vset.pattern.permute.xlu0 0
      %2008 = vperm.xlu0 %2007, %v1280
      %v2009 = vpop.permute.xlu0 %2008
      %2012 = vset.pattern.permute.xlu0 0
      %2013 = vperm.xlu0 %2012, %v1282
      %v2014 = vpop.permute.xlu0 %2013
      %2017 = vset.pattern.permute.xlu0 0
      %2018 = vperm.xlu0 %2017, %v1284
      %v2019 = vpop.permute.xlu0 %2018
      %2022 = vset.pattern.permute.xlu0 0
      %2023 = vperm.xlu0 %2022, %v1286
      %v2024 = vpop.permute.xlu0 %2023
      %2027 = vset.pattern.permute.xlu0 0
      %2028 = vperm.xlu0 %2027, %v1288
      %v2029 = vpop.permute.xlu0 %2028
      %2032 = vset.pattern.permute.xlu0 0
      %2033 = vperm.xlu0 %2032, %v1290
      %v2034 = vpop.permute.xlu0 %2033
      %2037 = vset.pattern.permute.xlu0 0
      %2038 = vperm.xlu0 %2037, %v1292
      %v2039 = vpop.permute.xlu0 %2038
      %2042 = vset.pattern.permute.xlu0 0
      %2043 = vperm.xlu0 %2042, %v1294
      %v2044 = vpop.permute.xlu0 %2043
      %2047 = vset.pattern.permute.xlu0 0
      %2048 = vperm.xlu0 %2047, %v1296
      %v2049 = vpop.permute.xlu0 %2048
      %2052 = vset.pattern.permute.xlu0 0
      %2053 = vperm.xlu0 %2052, %v1298
      %v2054 = vpop.permute.xlu0 %2053
      %2057 = vset.pattern.permute.xlu0 0
      %2058 = vperm.xlu0 %2057, %v1300
      %v2059 = vpop.permute.xlu0 %2058
      %2062 = vset.pattern.permute.xlu0 0
      %2063 = vperm.xlu0 %2062, %v1302
      %v2064 = vpop.permute.xlu0 %2063
      %2067 = vset.pattern.permute.xlu0 0
      %2068 = vperm.xlu0 %2067, %v1304
      %v2069 = vpop.permute.xlu0 %2068
      %2072 = vset.pattern.permute.xlu0 0
      %2073 = vperm.xlu0 %2072, %v1306
      %v2074 = vpop.permute.xlu0 %2073
      %v2076 = vmul.f32 %v1919, %v1884
      %v2077 = vmul.f32 %v1924, %v1885
      %v2078 = vmul.f32 %v1929, %v1886
      %v2079 = vmul.f32 %v1934, %v1887
      %v2080 = vmul.f32 %v1939, %v1888
      %v2081 = vmul.f32 %v1944, %v1889
      %v2082 = vmul.f32 %v1949, %v1890
      %v2083 = vmul.f32 %v1954, %v1891
      %v2084 = vmul.f32 %v1959, %v1892
      %v2085 = vmul.f32 %v1964, %v1893
      %v2086 = vmul.f32 %v1969, %v1894
      %v2087 = vmul.f32 %v1974, %v1895
      %v2088 = vmul.f32 %v1979, %v1896
      %v2089 = vmul.f32 %v1984, %v1897
      %v2090 = vmul.f32 %v1989, %v1898
      %v2091 = vmul.f32 %v1994, %v1899
      %v2092 = vmul.f32 %v1999, %v1900
      %v2093 = vmul.f32 %v2004, %v1901
      %v2094 = vmul.f32 %v2009, %v1902
      %v2095 = vmul.f32 %v2014, %v1903
      %v2096 = vmul.f32 %v2019, %v1904
      %v2097 = vmul.f32 %v2024, %v1905
      %v2098 = vmul.f32 %v2029, %v1906
      %v2099 = vmul.f32 %v2034, %v1907
      %v2100 = vmul.f32 %v2039, %v1908
      %v2101 = vmul.f32 %v2044, %v1909
      %v2102 = vmul.f32 %v2049, %v1910
      %v2103 = vmul.f32 %v2054, %v1911
      %v2104 = vmul.f32 %v2059, %v1912
      %v2105 = vmul.f32 %v2064, %v1913
      %v2106 = vmul.f32 %v2069, %v1914
      %v2107 = vmul.f32 %v2074, %v1915
      %v2108 = vpack.c.bf16 %v1536, %v1532
      %v2109 = vpack.c.bf16 %v1538, %v1534
      %v2110 = vpack.c.bf16 %v1544, %v1540
      %v2111 = vpack.c.bf16 %v1546, %v1542
      %v2112 = vpack.c.bf16 %v1552, %v1548
      %v2113 = vpack.c.bf16 %v1554, %v1550
      %v2114 = vpack.c.bf16 %v1560, %v1556
      %v2115 = vpack.c.bf16 %v1562, %v1558
      %v2116 = vpack.c.bf16 %v1568, %v1564
      %v2117 = vpack.c.bf16 %v1570, %v1566
      %v2118 = vpack.c.bf16 %v1576, %v1572
      %v2119 = vpack.c.bf16 %v1578, %v1574
      %v2120 = vpack.c.bf16 %v1584, %v1580
      %v2121 = vpack.c.bf16 %v1586, %v1582
      %v2122 = vpack.c.bf16 %v1592, %v1588
      %v2123 = vpack.c.bf16 %v1594, %v1590
      %v2124 = vpack.c.bf16 %v1600, %v1596
      %v2125 = vpack.c.bf16 %v1602, %v1598
      %v2126 = vpack.c.bf16 %v1608, %v1604
      %v2127 = vpack.c.bf16 %v1610, %v1606
      %v2128 = vpack.c.bf16 %v1616, %v1612
      %v2129 = vpack.c.bf16 %v1618, %v1614
      %v2130 = vpack.c.bf16 %v1624, %v1620
      %v2131 = vpack.c.bf16 %v1626, %v1622
      %v2132 = vpack.c.bf16 %v1632, %v1628
      %v2133 = vpack.c.bf16 %v1634, %v1630
      %v2134 = vpack.c.bf16 %v1640, %v1636
      %v2135 = vpack.c.bf16 %v1642, %v1638
      %v2136 = vpack.c.bf16 %v1648, %v1644
      %v2137 = vpack.c.bf16 %v1650, %v1646
      %v2138 = vpack.c.bf16 %v1656, %v1652
      %v2139 = vpack.c.bf16 %v1658, %v1654
      %v2140 = vld [vmem:[%s277] sm:$0xf]
      %v2141 = vld [vmem:[%s277 + $0x4] sm:$0xf]
      %v2142 = vld [vmem:[%s277 + $0x8] sm:$0xf]
      %v2143 = vld [vmem:[%s277 + $0xc] sm:$0xf]
      %v2144 = vld [vmem:[%s277 + $0x10] sm:$0xf]
      %v2145 = vld [vmem:[%s277 + $0x14] sm:$0xf]
      %v2146 = vld [vmem:[%s277 + $0x18] sm:$0xf]
      %v2147 = vld [vmem:[%s277 + $0x1c] sm:$0xf]
      %v2148 = vld [vmem:[%s277 + $0x20] sm:$0xf]
      %v2149 = vld [vmem:[%s277 + $0x24] sm:$0xf]
      %v2150 = vld [vmem:[%s277 + $0x28] sm:$0xf]
      %v2151 = vld [vmem:[%s277 + $0x2c] sm:$0xf]
      %v2152 = vld [vmem:[%s277 + $0x30] sm:$0xf]
      %v2153 = vld [vmem:[%s277 + $0x34] sm:$0xf]
      %v2154 = vld [vmem:[%s277 + $0x38] sm:$0xf]
      %v2155 = vld [vmem:[%s277 + $0x3c] sm:$0xf]
      %v2156 = vld [vmem:[%s277 + $0x40] sm:$0xf]
      %v2157 = vld [vmem:[%s277 + $0x44] sm:$0xf]
      %v2158 = vld [vmem:[%s277 + $0x48] sm:$0xf]
      %v2159 = vld [vmem:[%s277 + $0x4c] sm:$0xf]
      %v2160 = vld [vmem:[%s277 + $0x50] sm:$0xf]
      %v2161 = vld [vmem:[%s277 + $0x54] sm:$0xf]
      %v2162 = vld [vmem:[%s277 + $0x58] sm:$0xf]
      %v2163 = vld [vmem:[%s277 + $0x5c] sm:$0xf]
      %v2164 = vld [vmem:[%s277 + $0x60] sm:$0xf]
      %v2165 = vld [vmem:[%s277 + $0x64] sm:$0xf]
      %v2166 = vld [vmem:[%s277 + $0x68] sm:$0xf]
      %v2167 = vld [vmem:[%s277 + $0x6c] sm:$0xf]
      %v2168 = vld [vmem:[%s277 + $0x70] sm:$0xf]
      %v2169 = vld [vmem:[%s277 + $0x74] sm:$0xf]
      %v2170 = vld [vmem:[%s277 + $0x78] sm:$0xf]
      %v2171 = vld [vmem:[%s277 + $0x7c] sm:$0xf]
      %v2204 = vunpack.c.l.b16 %v2140
      %v2205 = vunpack.c.l.b16 %v2141
      %v2206 = vunpack.c.l.b16 %v2142
      %v2207 = vunpack.c.l.b16 %v2143
      %v2208 = vunpack.c.l.b16 %v2144
      %v2209 = vunpack.c.l.b16 %v2145
      %v2210 = vunpack.c.l.b16 %v2146
      %v2211 = vunpack.c.l.b16 %v2147
      %v2212 = vunpack.c.l.b16 %v2148
      %v2213 = vunpack.c.l.b16 %v2149
      %v2214 = vunpack.c.l.b16 %v2150
      %v2215 = vunpack.c.l.b16 %v2151
      %v2216 = vunpack.c.l.b16 %v2152
      %v2217 = vunpack.c.l.b16 %v2153
      %v2218 = vunpack.c.l.b16 %v2154
      %v2219 = vunpack.c.l.b16 %v2155
      %v2220 = vunpack.c.l.b16 %v2156
      %v2221 = vunpack.c.l.b16 %v2157
      %v2222 = vunpack.c.l.b16 %v2158
      %v2223 = vunpack.c.l.b16 %v2159
      %v2224 = vunpack.c.l.b16 %v2160
      %v2225 = vunpack.c.l.b16 %v2161
      %v2226 = vunpack.c.l.b16 %v2162
      %v2227 = vunpack.c.l.b16 %v2163
      %v2228 = vunpack.c.l.b16 %v2164
      %v2229 = vunpack.c.l.b16 %v2165
      %v2230 = vunpack.c.l.b16 %v2166
      %v2231 = vunpack.c.l.b16 %v2167
      %v2232 = vunpack.c.l.b16 %v2168
      %v2233 = vunpack.c.l.b16 %v2169
      %v2234 = vunpack.c.l.b16 %v2170
      %v2235 = vunpack.c.l.b16 %v2171
      %v2236 = vpack.c.b16 %v2205, %v2204
      %v2237 = vpack.c.b16 %v2207, %v2206
      %v2238 = vpack.c.b16 %v2209, %v2208
      %v2239 = vpack.c.b16 %v2211, %v2210
      %v2240 = vpack.c.b16 %v2213, %v2212
      %v2241 = vpack.c.b16 %v2215, %v2214
      %v2242 = vpack.c.b16 %v2217, %v2216
      %v2243 = vpack.c.b16 %v2219, %v2218
      %v2244 = vpack.c.b16 %v2221, %v2220
      %v2245 = vpack.c.b16 %v2223, %v2222
      %v2246 = vpack.c.b16 %v2225, %v2224
      %v2247 = vpack.c.b16 %v2227, %v2226
      %v2248 = vpack.c.b16 %v2229, %v2228
      %v2249 = vpack.c.b16 %v2231, %v2230
      %v2250 = vpack.c.b16 %v2233, %v2232
      %v2251 = vpack.c.b16 %v2235, %v2234
      %2268 = vmatpush.bf16.msra.mxu0 %v2243
      %2269 = vmatpush.bf16.msra.mxu0 %v2242
      %2270 = vmatpush.bf16.msra.mxu0 %v2241
      %2271 = vmatpush.bf16.msra.mxu0 %v2240
      %2272 = vmatpush.bf16.msra.mxu0 %v2239
      %2273 = vmatpush.bf16.msra.mxu0 %v2238
      %2274 = vmatpush.bf16.msra.mxu0 %v2237
      %2275 = vmatpush.bf16.msra.mxu0 %v2236
      %2276 = vmatmul.bf16.gmra.mxu0 %v2108
      %v2277 = vpop.f32.mrf.mxu0
      %v2278 = vadd.f32 0.0, %v2277
      %v2279 = vpop.f32.mrf.mxu0
      %v2280 = vadd.f32 0.0, %v2279
      %2281 = vmatmul.bf16.gmra.mxu0 %v2110
      %v2282 = vpop.f32.mrf.mxu0
      %v2283 = vadd.f32 0.0, %v2282
      %v2284 = vpop.f32.mrf.mxu0
      %v2285 = vadd.f32 0.0, %v2284
      %2286 = vmatmul.bf16.gmra.mxu0 %v2112
      %v2287 = vpop.f32.mrf.mxu0
      %v2288 = vadd.f32 0.0, %v2287
      %v2289 = vpop.f32.mrf.mxu0
      %v2290 = vadd.f32 0.0, %v2289
      %2291 = vmatmul.bf16.gmra.mxu0 %v2114
      %v2292 = vpop.f32.mrf.mxu0
      %v2293 = vadd.f32 0.0, %v2292
      %v2294 = vpop.f32.mrf.mxu0
      %v2295 = vadd.f32 0.0, %v2294
      %2296 = vmatmul.bf16.gmra.mxu0 %v2116
      %v2297 = vpop.f32.mrf.mxu0
      %v2298 = vadd.f32 0.0, %v2297
      %v2299 = vpop.f32.mrf.mxu0
      %v2300 = vadd.f32 0.0, %v2299
      %2301 = vmatmul.bf16.gmra.mxu0 %v2118
      %v2302 = vpop.f32.mrf.mxu0
      %v2303 = vadd.f32 0.0, %v2302
      %v2304 = vpop.f32.mrf.mxu0
      %v2305 = vadd.f32 0.0, %v2304
      %2306 = vmatmul.bf16.gmra.mxu0 %v2120
      %v2307 = vpop.f32.mrf.mxu0
      %v2308 = vadd.f32 0.0, %v2307
      %v2309 = vpop.f32.mrf.mxu0
      %v2310 = vadd.f32 0.0, %v2309
      %2311 = vmatmul.bf16.gmra.mxu0 %v2122
      %v2312 = vpop.f32.mrf.mxu0
      %v2313 = vadd.f32 0.0, %v2312
      %v2314 = vpop.f32.mrf.mxu0
      %v2315 = vadd.f32 0.0, %v2314
      %2316 = vmatmul.bf16.gmra.mxu0 %v2124
      %v2317 = vpop.f32.mrf.mxu0
      %v2318 = vadd.f32 0.0, %v2317
      %v2319 = vpop.f32.mrf.mxu0
      %v2320 = vadd.f32 0.0, %v2319
      %2321 = vmatmul.bf16.gmra.mxu0 %v2126
      %v2322 = vpop.f32.mrf.mxu0
      %v2323 = vadd.f32 0.0, %v2322
      %v2324 = vpop.f32.mrf.mxu0
      %v2325 = vadd.f32 0.0, %v2324
      %2326 = vmatmul.bf16.gmra.mxu0 %v2128
      %v2327 = vpop.f32.mrf.mxu0
      %v2328 = vadd.f32 0.0, %v2327
      %v2329 = vpop.f32.mrf.mxu0
      %v2330 = vadd.f32 0.0, %v2329
      %2331 = vmatmul.bf16.gmra.mxu0 %v2130
      %v2332 = vpop.f32.mrf.mxu0
      %v2333 = vadd.f32 0.0, %v2332
      %v2334 = vpop.f32.mrf.mxu0
      %v2335 = vadd.f32 0.0, %v2334
      %2336 = vmatmul.bf16.gmra.mxu0 %v2132
      %v2337 = vpop.f32.mrf.mxu0
      %v2338 = vadd.f32 0.0, %v2337
      %v2339 = vpop.f32.mrf.mxu0
      %v2340 = vadd.f32 0.0, %v2339
      %2341 = vmatmul.bf16.gmra.mxu0 %v2134
      %v2342 = vpop.f32.mrf.mxu0
      %v2343 = vadd.f32 0.0, %v2342
      %v2344 = vpop.f32.mrf.mxu0
      %v2345 = vadd.f32 0.0, %v2344
      %2346 = vmatmul.bf16.gmra.mxu0 %v2136
      %v2347 = vpop.f32.mrf.mxu0
      %v2348 = vadd.f32 0.0, %v2347
      %v2349 = vpop.f32.mrf.mxu0
      %v2350 = vadd.f32 0.0, %v2349
      %2351 = vmatmul.bf16.gmra.mxu0 %v2138
      %v2352 = vpop.f32.mrf.mxu0
      %v2353 = vadd.f32 0.0, %v2352
      %v2354 = vpop.f32.mrf.mxu0
      %v2355 = vadd.f32 0.0, %v2354
      %2356 = vdwg.mxu0
      %2357 = vmatpush.bf16.msra.mxu0 %v2251
      %2358 = vmatpush.bf16.msra.mxu0 %v2250
      %2359 = vmatpush.bf16.msra.mxu0 %v2249
      %2360 = vmatpush.bf16.msra.mxu0 %v2248
      %2361 = vmatpush.bf16.msra.mxu0 %v2247
      %2362 = vmatpush.bf16.msra.mxu0 %v2246
      %2363 = vmatpush.bf16.msra.mxu0 %v2245
      %2364 = vmatpush.bf16.msra.mxu0 %v2244
      %2365 = vmatmul.bf16.gmra.mxu0 %v2109
      %v2366 = vpop.f32.mrf.mxu0
      %v2367 = vadd.f32 %v2278, %v2366
      %v2368 = vpop.f32.mrf.mxu0
      %v2369 = vadd.f32 %v2280, %v2368
      %2370 = vmatmul.bf16.gmra.mxu0 %v2111
      %v2371 = vpop.f32.mrf.mxu0
      %v2372 = vadd.f32 %v2283, %v2371
      %v2373 = vpop.f32.mrf.mxu0
      %v2374 = vadd.f32 %v2285, %v2373
      %2375 = vmatmul.bf16.gmra.mxu0 %v2113
      %v2376 = vpop.f32.mrf.mxu0
      %v2377 = vadd.f32 %v2288, %v2376
      %v2378 = vpop.f32.mrf.mxu0
      %v2379 = vadd.f32 %v2290, %v2378
      %2380 = vmatmul.bf16.gmra.mxu0 %v2115
      %v2381 = vpop.f32.mrf.mxu0
      %v2382 = vadd.f32 %v2293, %v2381
      %v2383 = vpop.f32.mrf.mxu0
      %v2384 = vadd.f32 %v2295, %v2383
      %2385 = vmatmul.bf16.gmra.mxu0 %v2117
      %v2386 = vpop.f32.mrf.mxu0
      %v2387 = vadd.f32 %v2298, %v2386
      %v2388 = vpop.f32.mrf.mxu0
      %v2389 = vadd.f32 %v2300, %v2388
      %2390 = vmatmul.bf16.gmra.mxu0 %v2119
      %v2391 = vpop.f32.mrf.mxu0
      %v2392 = vadd.f32 %v2303, %v2391
      %v2393 = vpop.f32.mrf.mxu0
      %v2394 = vadd.f32 %v2305, %v2393
      %2395 = vmatmul.bf16.gmra.mxu0 %v2121
      %v2396 = vpop.f32.mrf.mxu0
      %v2397 = vadd.f32 %v2308, %v2396
      %v2398 = vpop.f32.mrf.mxu0
      %v2399 = vadd.f32 %v2310, %v2398
      %2400 = vmatmul.bf16.gmra.mxu0 %v2123
      %v2401 = vpop.f32.mrf.mxu0
      %v2402 = vadd.f32 %v2313, %v2401
      %v2403 = vpop.f32.mrf.mxu0
      %v2404 = vadd.f32 %v2315, %v2403
      %2405 = vmatmul.bf16.gmra.mxu0 %v2125
      %v2406 = vpop.f32.mrf.mxu0
      %v2407 = vadd.f32 %v2318, %v2406
      %v2408 = vpop.f32.mrf.mxu0
      %v2409 = vadd.f32 %v2320, %v2408
      %2410 = vmatmul.bf16.gmra.mxu0 %v2127
      %v2411 = vpop.f32.mrf.mxu0
      %v2412 = vadd.f32 %v2323, %v2411
      %v2413 = vpop.f32.mrf.mxu0
      %v2414 = vadd.f32 %v2325, %v2413
      %2415 = vmatmul.bf16.gmra.mxu0 %v2129
      %v2416 = vpop.f32.mrf.mxu0
      %v2417 = vadd.f32 %v2328, %v2416
      %v2418 = vpop.f32.mrf.mxu0
      %v2419 = vadd.f32 %v2330, %v2418
      %2420 = vmatmul.bf16.gmra.mxu0 %v2131
      %v2421 = vpop.f32.mrf.mxu0
      %v2422 = vadd.f32 %v2333, %v2421
      %v2423 = vpop.f32.mrf.mxu0
      %v2424 = vadd.f32 %v2335, %v2423
      %2425 = vmatmul.bf16.gmra.mxu0 %v2133
      %v2426 = vpop.f32.mrf.mxu0
      %v2427 = vadd.f32 %v2338, %v2426
      %v2428 = vpop.f32.mrf.mxu0
      %v2429 = vadd.f32 %v2340, %v2428
      %2430 = vmatmul.bf16.gmra.mxu0 %v2135
      %v2431 = vpop.f32.mrf.mxu0
      %v2432 = vadd.f32 %v2343, %v2431
      %v2433 = vpop.f32.mrf.mxu0
      %v2434 = vadd.f32 %v2345, %v2433
      %2435 = vmatmul.bf16.gmra.mxu0 %v2137
      %v2436 = vpop.f32.mrf.mxu0
      %v2437 = vadd.f32 %v2348, %v2436
      %v2438 = vpop.f32.mrf.mxu0
      %v2439 = vadd.f32 %v2350, %v2438
      %2440 = vmatmul.bf16.gmra.mxu0 %v2139
      %v2441 = vpop.f32.mrf.mxu0
      %v2442 = vadd.f32 %v2353, %v2441
      %v2443 = vpop.f32.mrf.mxu0
      %v2444 = vadd.f32 %v2355, %v2443
      %2445 = vdwg.mxu0
      %v2446 = vadd.f32 %v2076, %v2367
      %v2447 = vadd.f32 %v2077, %v2369
      %v2448 = vadd.f32 %v2078, %v2372
      %v2449 = vadd.f32 %v2079, %v2374
      %v2450 = vadd.f32 %v2080, %v2377
      %v2451 = vadd.f32 %v2081, %v2379
      %v2452 = vadd.f32 %v2082, %v2382
      %v2453 = vadd.f32 %v2083, %v2384
      %v2454 = vadd.f32 %v2084, %v2387
      %v2455 = vadd.f32 %v2085, %v2389
      %v2456 = vadd.f32 %v2086, %v2392
      %v2457 = vadd.f32 %v2087, %v2394
      %v2458 = vadd.f32 %v2088, %v2397
      %v2459 = vadd.f32 %v2089, %v2399
      %v2460 = vadd.f32 %v2090, %v2402
      %v2461 = vadd.f32 %v2091, %v2404
      %v2462 = vadd.f32 %v2092, %v2407
      %v2463 = vadd.f32 %v2093, %v2409
      %v2464 = vadd.f32 %v2094, %v2412
      %v2465 = vadd.f32 %v2095, %v2414
      %v2466 = vadd.f32 %v2096, %v2417
      %v2467 = vadd.f32 %v2097, %v2419
      %v2468 = vadd.f32 %v2098, %v2422
      %v2469 = vadd.f32 %v2099, %v2424
      %v2470 = vadd.f32 %v2100, %v2427
      %v2471 = vadd.f32 %v2101, %v2429
      %v2472 = vadd.f32 %v2102, %v2432
      %v2473 = vadd.f32 %v2103, %v2434
      %v2474 = vadd.f32 %v2104, %v2437
      %v2475 = vadd.f32 %v2105, %v2439
      %v2476 = vadd.f32 %v2106, %v2442
      %v2477 = vadd.f32 %v2107, %v2444
      %2478 = vst.msk [vmem:[#allocation5] sm:$0xff] %vm776, %v2446
      %2479 = vst.msk [vmem:[#allocation5 + $0x8] sm:$0xff] %vm776, %v2447
      %2480 = vst.msk [vmem:[#allocation5 + $0x10] sm:$0xff] %vm776, %v2448
      %2481 = vst.msk [vmem:[#allocation5 + $0x18] sm:$0xff] %vm776, %v2449
      %2482 = vst.msk [vmem:[#allocation5 + $0x20] sm:$0xff] %vm776, %v2450
      %2483 = vst.msk [vmem:[#allocation5 + $0x28] sm:$0xff] %vm776, %v2451
      %2484 = vst.msk [vmem:[#allocation5 + $0x30] sm:$0xff] %vm776, %v2452
      %2485 = vst.msk [vmem:[#allocation5 + $0x38] sm:$0xff] %vm776, %v2453
      %2486 = vst.msk [vmem:[#allocation5 + $0x40] sm:$0xff] %vm776, %v2454
      %2487 = vst.msk [vmem:[#allocation5 + $0x48] sm:$0xff] %vm776, %v2455
      %2488 = vst.msk [vmem:[#allocation5 + $0x50] sm:$0xff] %vm776, %v2456
      %2489 = vst.msk [vmem:[#allocation5 + $0x58] sm:$0xff] %vm776, %v2457
      %2490 = vst.msk [vmem:[#allocation5 + $0x60] sm:$0xff] %vm776, %v2458
      %2491 = vst.msk [vmem:[#allocation5 + $0x68] sm:$0xff] %vm776, %v2459
      %2492 = vst.msk [vmem:[#allocation5 + $0x70] sm:$0xff] %vm776, %v2460
      %2493 = vst.msk [vmem:[#allocation5 + $0x78] sm:$0xff] %vm776, %v2461
      %2494 = vst.msk [vmem:[#allocation5 + $0x80] sm:$0xff] %vm776, %v2462
      %2495 = vst.msk [vmem:[#allocation5 + $0x88] sm:$0xff] %vm776, %v2463
      %2496 = vst.msk [vmem:[#allocation5 + $0x90] sm:$0xff] %vm776, %v2464
      %2497 = vst.msk [vmem:[#allocation5 + $0x98] sm:$0xff] %vm776, %v2465
      %2498 = vst.msk [vmem:[#allocation5 + $0xa0] sm:$0xff] %vm776, %v2466
      %2499 = vst.msk [vmem:[#allocation5 + $0xa8] sm:$0xff] %vm776, %v2467
      %2500 = vst.msk [vmem:[#allocation5 + $0xb0] sm:$0xff] %vm776, %v2468
      %2501 = vst.msk [vmem:[#allocation5 + $0xb8] sm:$0xff] %vm776, %v2469
      %2502 = vst.msk [vmem:[#allocation5 + $0xc0] sm:$0xff] %vm776, %v2470
      %2503 = vst.msk [vmem:[#allocation5 + $0xc8] sm:$0xff] %vm776, %v2471
      %2504 = vst.msk [vmem:[#allocation5 + $0xd0] sm:$0xff] %vm776, %v2472
      %2505 = vst.msk [vmem:[#allocation5 + $0xd8] sm:$0xff] %vm776, %v2473
      %2506 = vst.msk [vmem:[#allocation5 + $0xe0] sm:$0xff] %vm776, %v2474
      %2507 = vst.msk [vmem:[#allocation5 + $0xe8] sm:$0xff] %vm776, %v2475
      %2508 = vst.msk [vmem:[#allocation5 + $0xf0] sm:$0xff] %vm776, %v2476
      %2509 = vst.msk [vmem:[#allocation5 + $0xf8] sm:$0xff] %vm776, %v2477
      %2510 = vst.msk [vmem:[#allocation3] sm:$0xff] %vm1851, %v1179
      %2511 = vst.msk [vmem:[#allocation3 + $0x8] sm:$0xff] %vm1851, %v1180
      %2512 = vst.msk [vmem:[#allocation3 + $0x10] sm:$0xff] %vm1851, %v1181
      %2513 = vst.msk [vmem:[#allocation3 + $0x18] sm:$0xff] %vm1851, %v1182
      %2514 = vst.msk [vmem:[#allocation3 + $0x20] sm:$0xff] %vm1851, %v1183
      %2515 = vst.msk [vmem:[#allocation3 + $0x28] sm:$0xff] %vm1851, %v1184
      %2516 = vst.msk [vmem:[#allocation3 + $0x30] sm:$0xff] %vm1851, %v1185
      %2517 = vst.msk [vmem:[#allocation3 + $0x38] sm:$0xff] %vm1851, %v1186
      %2518 = vst.msk [vmem:[#allocation3 + $0x40] sm:$0xff] %vm1851, %v1187
      %2519 = vst.msk [vmem:[#allocation3 + $0x48] sm:$0xff] %vm1851, %v1188
      %2520 = vst.msk [vmem:[#allocation3 + $0x50] sm:$0xff] %vm1851, %v1189
      %2521 = vst.msk [vmem:[#allocation3 + $0x58] sm:$0xff] %vm1851, %v1190
      %2522 = vst.msk [vmem:[#allocation3 + $0x60] sm:$0xff] %vm1851, %v1191
      %2523 = vst.msk [vmem:[#allocation3 + $0x68] sm:$0xff] %vm1851, %v1192
      %2524 = vst.msk [vmem:[#allocation3 + $0x70] sm:$0xff] %vm1851, %v1193
      %2525 = vst.msk [vmem:[#allocation3 + $0x78] sm:$0xff] %vm1851, %v1194
      %2526 = vst.msk [vmem:[#allocation3 + $0x80] sm:$0xff] %vm1851, %v1195
      %2527 = vst.msk [vmem:[#allocation3 + $0x88] sm:$0xff] %vm1851, %v1196
      %2528 = vst.msk [vmem:[#allocation3 + $0x90] sm:$0xff] %vm1851, %v1197
      %2529 = vst.msk [vmem:[#allocation3 + $0x98] sm:$0xff] %vm1851, %v1198
      %2530 = vst.msk [vmem:[#allocation3 + $0xa0] sm:$0xff] %vm1851, %v1199
      %2531 = vst.msk [vmem:[#allocation3 + $0xa8] sm:$0xff] %vm1851, %v1200
      %2532 = vst.msk [vmem:[#allocation3 + $0xb0] sm:$0xff] %vm1851, %v1201
      %2533 = vst.msk [vmem:[#allocation3 + $0xb8] sm:$0xff] %vm1851, %v1202
      %2534 = vst.msk [vmem:[#allocation3 + $0xc0] sm:$0xff] %vm1851, %v1203
      %2535 = vst.msk [vmem:[#allocation3 + $0xc8] sm:$0xff] %vm1851, %v1204
      %2536 = vst.msk [vmem:[#allocation3 + $0xd0] sm:$0xff] %vm1851, %v1205
      %2537 = vst.msk [vmem:[#allocation3 + $0xd8] sm:$0xff] %vm1851, %v1206
      %2538 = vst.msk [vmem:[#allocation3 + $0xe0] sm:$0xff] %vm1851, %v1207
      %2539 = vst.msk [vmem:[#allocation3 + $0xe8] sm:$0xff] %vm1851, %v1208
      %2540 = vst.msk [vmem:[#allocation3 + $0xf0] sm:$0xff] %vm1851, %v1209
      %2541 = vst.msk [vmem:[#allocation3 + $0xf8] sm:$0xff] %vm1851, %v1210
      // Predicated region
      $region37: #{tpu_custom_call.1} parent=31 // pred_check
        %p2542 = pneg %p289
      $region38: #{tpu_custom_call.1} parent=31 // pred_check_branch
        %2544 = sbr.rel (%p2542) target = $region40
      $region39: #{tpu_custom_call.1} parent=31 // pred_region
        %v2545 = vld [vmem:[#allocation4] sm:$0xff]
        %v2546 = vld [vmem:[#allocation4 + $0x8] sm:$0xff]
        %v2547 = vld [vmem:[#allocation4 + $0x10] sm:$0xff]
        %v2548 = vld [vmem:[#allocation4 + $0x18] sm:$0xff]
        %v2549 = vld [vmem:[#allocation4 + $0x20] sm:$0xff]
        %v2550 = vld [vmem:[#allocation4 + $0x28] sm:$0xff]
        %v2551 = vld [vmem:[#allocation4 + $0x30] sm:$0xff]
        %v2552 = vld [vmem:[#allocation4 + $0x38] sm:$0xff]
        %v2553 = vld [vmem:[#allocation4 + $0x40] sm:$0xff]
        %v2554 = vld [vmem:[#allocation4 + $0x48] sm:$0xff]
        %v2555 = vld [vmem:[#allocation4 + $0x50] sm:$0xff]
        %v2556 = vld [vmem:[#allocation4 + $0x58] sm:$0xff]
        %v2557 = vld [vmem:[#allocation4 + $0x60] sm:$0xff]
        %v2558 = vld [vmem:[#allocation4 + $0x68] sm:$0xff]
        %v2559 = vld [vmem:[#allocation4 + $0x70] sm:$0xff]
        %v2560 = vld [vmem:[#allocation4 + $0x78] sm:$0xff]
        %v2561 = vld [vmem:[#allocation4 + $0x80] sm:$0xff]
        %v2562 = vld [vmem:[#allocation4 + $0x88] sm:$0xff]
        %v2563 = vld [vmem:[#allocation4 + $0x90] sm:$0xff]
        %v2564 = vld [vmem:[#allocation4 + $0x98] sm:$0xff]
        %v2565 = vld [vmem:[#allocation4 + $0xa0] sm:$0xff]
        %v2566 = vld [vmem:[#allocation4 + $0xa8] sm:$0xff]
        %v2567 = vld [vmem:[#allocation4 + $0xb0] sm:$0xff]
        %v2568 = vld [vmem:[#allocation4 + $0xb8] sm:$0xff]
        %v2569 = vld [vmem:[#allocation4 + $0xc0] sm:$0xff]
        %v2570 = vld [vmem:[#allocation4 + $0xc8] sm:$0xff]
        %v2571 = vld [vmem:[#allocation4 + $0xd0] sm:$0xff]
        %v2572 = vld [vmem:[#allocation4 + $0xd8] sm:$0xff]
        %v2573 = vld [vmem:[#allocation4 + $0xe0] sm:$0xff]
        %v2574 = vld [vmem:[#allocation4 + $0xe8] sm:$0xff]
        %v2575 = vld [vmem:[#allocation4 + $0xf0] sm:$0xff]
        %v2576 = vld [vmem:[#allocation4 + $0xf8] sm:$0xff]
        %v2577 = vrcp.pop %v2545
        %v2578 = vrcp.pop %v2546
        %v2579 = vrcp.pop %v2547
        %v2580 = vrcp.pop %v2548
        %v2581 = vrcp.pop %v2549
        %v2582 = vrcp.pop %v2550
        %v2583 = vrcp.pop %v2551
        %v2584 = vrcp.pop %v2552
        %v2585 = vrcp.pop %v2553
        %v2586 = vrcp.pop %v2554
        %v2587 = vrcp.pop %v2555
        %v2588 = vrcp.pop %v2556
        %v2589 = vrcp.pop %v2557
        %v2590 = vrcp.pop %v2558
        %v2591 = vrcp.pop %v2559
        %v2592 = vrcp.pop %v2560
        %v2593 = vrcp.pop %v2561
        %v2594 = vrcp.pop %v2562
        %v2595 = vrcp.pop %v2563
        %v2596 = vrcp.pop %v2564
        %v2597 = vrcp.pop %v2565
        %v2598 = vrcp.pop %v2566
        %v2599 = vrcp.pop %v2567
        %v2600 = vrcp.pop %v2568
        %v2601 = vrcp.pop %v2569
        %v2602 = vrcp.pop %v2570
        %v2603 = vrcp.pop %v2571
        %v2604 = vrcp.pop %v2572
        %v2605 = vrcp.pop %v2573
        %v2606 = vrcp.pop %v2574
        %v2607 = vrcp.pop %v2575
        %v2608 = vrcp.pop %v2576
        %v2609 = vld [vmem:[#allocation5] sm:$0xff]
        %v2610 = vld [vmem:[#allocation5 + $0x8] sm:$0xff]
        %v2611 = vld [vmem:[#allocation5 + $0x10] sm:$0xff]
        %v2612 = vld [vmem:[#allocation5 + $0x18] sm:$0xff]
        %v2613 = vld [vmem:[#allocation5 + $0x20] sm:$0xff]
        %v2614 = vld [vmem:[#allocation5 + $0x28] sm:$0xff]
        %v2615 = vld [vmem:[#allocation5 + $0x30] sm:$0xff]
        %v2616 = vld [vmem:[#allocation5 + $0x38] sm:$0xff]
        %v2617 = vld [vmem:[#allocation5 + $0x40] sm:$0xff]
        %v2618 = vld [vmem:[#allocation5 + $0x48] sm:$0xff]
        %v2619 = vld [vmem:[#allocation5 + $0x50] sm:$0xff]
        %v2620 = vld [vmem:[#allocation5 + $0x58] sm:$0xff]
        %v2621 = vld [vmem:[#allocation5 + $0x60] sm:$0xff]
        %v2622 = vld [vmem:[#allocation5 + $0x68] sm:$0xff]
        %v2623 = vld [vmem:[#allocation5 + $0x70] sm:$0xff]
        %v2624 = vld [vmem:[#allocation5 + $0x78] sm:$0xff]
        %v2625 = vld [vmem:[#allocation5 + $0x80] sm:$0xff]
        %v2626 = vld [vmem:[#allocation5 + $0x88] sm:$0xff]
        %v2627 = vld [vmem:[#allocation5 + $0x90] sm:$0xff]
        %v2628 = vld [vmem:[#allocation5 + $0x98] sm:$0xff]
        %v2629 = vld [vmem:[#allocation5 + $0xa0] sm:$0xff]
        %v2630 = vld [vmem:[#allocation5 + $0xa8] sm:$0xff]
        %v2631 = vld [vmem:[#allocation5 + $0xb0] sm:$0xff]
        %v2632 = vld [vmem:[#allocation5 + $0xb8] sm:$0xff]
        %v2633 = vld [vmem:[#allocation5 + $0xc0] sm:$0xff]
        %v2634 = vld [vmem:[#allocation5 + $0xc8] sm:$0xff]
        %v2635 = vld [vmem:[#allocation5 + $0xd0] sm:$0xff]
        %v2636 = vld [vmem:[#allocation5 + $0xd8] sm:$0xff]
        %v2637 = vld [vmem:[#allocation5 + $0xe0] sm:$0xff]
        %v2638 = vld [vmem:[#allocation5 + $0xe8] sm:$0xff]
        %v2639 = vld [vmem:[#allocation5 + $0xf0] sm:$0xff]
        %v2640 = vld [vmem:[#allocation5 + $0xf8] sm:$0xff]
        %2642 = vset.pattern.permute.xlu0 0
        %2643 = vperm.xlu0 %2642, %v2577
        %v2644 = vpop.permute.xlu0 %2643
        %2647 = vset.pattern.permute.xlu0 0
        %2648 = vperm.xlu0 %2647, %v2578
        %v2649 = vpop.permute.xlu0 %2648
        %2652 = vset.pattern.permute.xlu0 0
        %2653 = vperm.xlu0 %2652, %v2579
        %v2654 = vpop.permute.xlu0 %2653
        %2657 = vset.pattern.permute.xlu0 0
        %2658 = vperm.xlu0 %2657, %v2580
        %v2659 = vpop.permute.xlu0 %2658
        %2662 = vset.pattern.permute.xlu0 0
        %2663 = vperm.xlu0 %2662, %v2581
        %v2664 = vpop.permute.xlu0 %2663
        %2667 = vset.pattern.permute.xlu0 0
        %2668 = vperm.xlu0 %2667, %v2582
        %v2669 = vpop.permute.xlu0 %2668
        %2672 = vset.pattern.permute.xlu0 0
        %2673 = vperm.xlu0 %2672, %v2583
        %v2674 = vpop.permute.xlu0 %2673
        %2677 = vset.pattern.permute.xlu0 0
        %2678 = vperm.xlu0 %2677, %v2584
        %v2679 = vpop.permute.xlu0 %2678
        %2682 = vset.pattern.permute.xlu0 0
        %2683 = vperm.xlu0 %2682, %v2585
        %v2684 = vpop.permute.xlu0 %2683
        %2687 = vset.pattern.permute.xlu0 0
        %2688 = vperm.xlu0 %2687, %v2586
        %v2689 = vpop.permute.xlu0 %2688
        %2692 = vset.pattern.permute.xlu0 0
        %2693 = vperm.xlu0 %2692, %v2587
        %v2694 = vpop.permute.xlu0 %2693
        %2697 = vset.pattern.permute.xlu0 0
        %2698 = vperm.xlu0 %2697, %v2588
        %v2699 = vpop.permute.xlu0 %2698
        %2702 = vset.pattern.permute.xlu0 0
        %2703 = vperm.xlu0 %2702, %v2589
        %v2704 = vpop.permute.xlu0 %2703
        %2707 = vset.pattern.permute.xlu0 0
        %2708 = vperm.xlu0 %2707, %v2590
        %v2709 = vpop.permute.xlu0 %2708
        %2712 = vset.pattern.permute.xlu0 0
        %2713 = vperm.xlu0 %2712, %v2591
        %v2714 = vpop.permute.xlu0 %2713
        %2717 = vset.pattern.permute.xlu0 0
        %2718 = vperm.xlu0 %2717, %v2592
        %v2719 = vpop.permute.xlu0 %2718
        %2722 = vset.pattern.permute.xlu0 0
        %2723 = vperm.xlu0 %2722, %v2593
        %v2724 = vpop.permute.xlu0 %2723
        %2727 = vset.pattern.permute.xlu0 0
        %2728 = vperm.xlu0 %2727, %v2594
        %v2729 = vpop.permute.xlu0 %2728
        %2732 = vset.pattern.permute.xlu0 0
        %2733 = vperm.xlu0 %2732, %v2595
        %v2734 = vpop.permute.xlu0 %2733
        %2737 = vset.pattern.permute.xlu0 0
        %2738 = vperm.xlu0 %2737, %v2596
        %v2739 = vpop.permute.xlu0 %2738
        %2742 = vset.pattern.permute.xlu0 0
        %2743 = vperm.xlu0 %2742, %v2597
        %v2744 = vpop.permute.xlu0 %2743
        %2747 = vset.pattern.permute.xlu0 0
        %2748 = vperm.xlu0 %2747, %v2598
        %v2749 = vpop.permute.xlu0 %2748
        %2752 = vset.pattern.permute.xlu0 0
        %2753 = vperm.xlu0 %2752, %v2599
        %v2754 = vpop.permute.xlu0 %2753
        %2757 = vset.pattern.permute.xlu0 0
        %2758 = vperm.xlu0 %2757, %v2600
        %v2759 = vpop.permute.xlu0 %2758
        %2762 = vset.pattern.permute.xlu0 0
        %2763 = vperm.xlu0 %2762, %v2601
        %v2764 = vpop.permute.xlu0 %2763
        %2767 = vset.pattern.permute.xlu0 0
        %2768 = vperm.xlu0 %2767, %v2602
        %v2769 = vpop.permute.xlu0 %2768
        %2772 = vset.pattern.permute.xlu0 0
        %2773 = vperm.xlu0 %2772, %v2603
        %v2774 = vpop.permute.xlu0 %2773
        %2777 = vset.pattern.permute.xlu0 0
        %2778 = vperm.xlu0 %2777, %v2604
        %v2779 = vpop.permute.xlu0 %2778
        %2782 = vset.pattern.permute.xlu0 0
        %2783 = vperm.xlu0 %2782, %v2605
        %v2784 = vpop.permute.xlu0 %2783
        %2787 = vset.pattern.permute.xlu0 0
        %2788 = vperm.xlu0 %2787, %v2606
        %v2789 = vpop.permute.xlu0 %2788
        %2792 = vset.pattern.permute.xlu0 0
        %2793 = vperm.xlu0 %2792, %v2607
        %v2794 = vpop.permute.xlu0 %2793
        %2797 = vset.pattern.permute.xlu0 0
        %2798 = vperm.xlu0 %2797, %v2608
        %v2799 = vpop.permute.xlu0 %2798
        %v2801 = vmul.f32 %v2609, %v2644
        %v2802 = vmul.f32 %v2610, %v2649
        %v2803 = vmul.f32 %v2611, %v2654
        %v2804 = vmul.f32 %v2612, %v2659
        %v2805 = vmul.f32 %v2613, %v2664
        %v2806 = vmul.f32 %v2614, %v2669
        %v2807 = vmul.f32 %v2615, %v2674
        %v2808 = vmul.f32 %v2616, %v2679
        %v2809 = vmul.f32 %v2617, %v2684
        %v2810 = vmul.f32 %v2618, %v2689
        %v2811 = vmul.f32 %v2619, %v2694
        %v2812 = vmul.f32 %v2620, %v2699
        %v2813 = vmul.f32 %v2621, %v2704
        %v2814 = vmul.f32 %v2622, %v2709
        %v2815 = vmul.f32 %v2623, %v2714
        %v2816 = vmul.f32 %v2624, %v2719
        %v2817 = vmul.f32 %v2625, %v2724
        %v2818 = vmul.f32 %v2626, %v2729
        %v2819 = vmul.f32 %v2627, %v2734
        %v2820 = vmul.f32 %v2628, %v2739
        %v2821 = vmul.f32 %v2629, %v2744
        %v2822 = vmul.f32 %v2630, %v2749
        %v2823 = vmul.f32 %v2631, %v2754
        %v2824 = vmul.f32 %v2632, %v2759
        %v2825 = vmul.f32 %v2633, %v2764
        %v2826 = vmul.f32 %v2634, %v2769
        %v2827 = vmul.f32 %v2635, %v2774
        %v2828 = vmul.f32 %v2636, %v2779
        %v2829 = vmul.f32 %v2637, %v2784
        %v2830 = vmul.f32 %v2638, %v2789
        %v2831 = vmul.f32 %v2639, %v2794
        %v2832 = vmul.f32 %v2640, %v2799
        %v2833 = vpack.c.bf16 %v2801, %v2801
        %v2834 = vpack.c.bf16 %v2802, %v2802
        %v2835 = vpack.c.bf16 %v2803, %v2803
        %v2836 = vpack.c.bf16 %v2804, %v2804
        %v2837 = vpack.c.bf16 %v2805, %v2805
        %v2838 = vpack.c.bf16 %v2806, %v2806
        %v2839 = vpack.c.bf16 %v2807, %v2807
        %v2840 = vpack.c.bf16 %v2808, %v2808
        %v2841 = vpack.c.bf16 %v2809, %v2809
        %v2842 = vpack.c.bf16 %v2810, %v2810
        %v2843 = vpack.c.bf16 %v2811, %v2811
        %v2844 = vpack.c.bf16 %v2812, %v2812
        %v2845 = vpack.c.bf16 %v2813, %v2813
        %v2846 = vpack.c.bf16 %v2814, %v2814
        %v2847 = vpack.c.bf16 %v2815, %v2815
        %v2848 = vpack.c.bf16 %v2816, %v2816
        %v2849 = vpack.c.bf16 %v2817, %v2817
        %v2850 = vpack.c.bf16 %v2818, %v2818
        %v2851 = vpack.c.bf16 %v2819, %v2819
        %v2852 = vpack.c.bf16 %v2820, %v2820
        %v2853 = vpack.c.bf16 %v2821, %v2821
        %v2854 = vpack.c.bf16 %v2822, %v2822
        %v2855 = vpack.c.bf16 %v2823, %v2823
        %v2856 = vpack.c.bf16 %v2824, %v2824
        %v2857 = vpack.c.bf16 %v2825, %v2825
        %v2858 = vpack.c.bf16 %v2826, %v2826
        %v2859 = vpack.c.bf16 %v2827, %v2827
        %v2860 = vpack.c.bf16 %v2828, %v2828
        %v2861 = vpack.c.bf16 %v2829, %v2829
        %v2862 = vpack.c.bf16 %v2830, %v2830
        %v2863 = vpack.c.bf16 %v2831, %v2831
        %v2864 = vpack.c.bf16 %v2832, %v2832
        %vm2865 = vcmask 519168
        %2866 = vst.msk [vmem:[%s287] sm:$0xf] %vm2865, %v2833
        %2867 = vst.msk [vmem:[%s287 + $0x4] sm:$0xf] %vm2865, %v2834
        %2868 = vst.msk [vmem:[%s287 + $0x8] sm:$0xf] %vm2865, %v2835
        %2869 = vst.msk [vmem:[%s287 + $0xc] sm:$0xf] %vm2865, %v2836
        %2870 = vst.msk [vmem:[%s287 + $0x10] sm:$0xf] %vm2865, %v2837
        %2871 = vst.msk [vmem:[%s287 + $0x14] sm:$0xf] %vm2865, %v2838
        %2872 = vst.msk [vmem:[%s287 + $0x18] sm:$0xf] %vm2865, %v2839
        %2873 = vst.msk [vmem:[%s287 + $0x1c] sm:$0xf] %vm2865, %v2840
        %2874 = vst.msk [vmem:[%s287 + $0x20] sm:$0xf] %vm2865, %v2841
        %2875 = vst.msk [vmem:[%s287 + $0x24] sm:$0xf] %vm2865, %v2842
        %2876 = vst.msk [vmem:[%s287 + $0x28] sm:$0xf] %vm2865, %v2843
        %2877 = vst.msk [vmem:[%s287 + $0x2c] sm:$0xf] %vm2865, %v2844
        %2878 = vst.msk [vmem:[%s287 + $0x30] sm:$0xf] %vm2865, %v2845
        %2879 = vst.msk [vmem:[%s287 + $0x34] sm:$0xf] %vm2865, %v2846
        %2880 = vst.msk [vmem:[%s287 + $0x38] sm:$0xf] %vm2865, %v2847
        %2881 = vst.msk [vmem:[%s287 + $0x3c] sm:$0xf] %vm2865, %v2848
        %2882 = vst.msk [vmem:[%s287 + $0x40] sm:$0xf] %vm2865, %v2849
        %2883 = vst.msk [vmem:[%s287 + $0x44] sm:$0xf] %vm2865, %v2850
        %2884 = vst.msk [vmem:[%s287 + $0x48] sm:$0xf] %vm2865, %v2851
        %2885 = vst.msk [vmem:[%s287 + $0x4c] sm:$0xf] %vm2865, %v2852
        %2886 = vst.msk [vmem:[%s287 + $0x50] sm:$0xf] %vm2865, %v2853
        %2887 = vst.msk [vmem:[%s287 + $0x54] sm:$0xf] %vm2865, %v2854
        %2888 = vst.msk [vmem:[%s287 + $0x58] sm:$0xf] %vm2865, %v2855
        %2889 = vst.msk [vmem:[%s287 + $0x5c] sm:$0xf] %vm2865, %v2856
        %2890 = vst.msk [vmem:[%s287 + $0x60] sm:$0xf] %vm2865, %v2857
        %2891 = vst.msk [vmem:[%s287 + $0x64] sm:$0xf] %vm2865, %v2858
        %2892 = vst.msk [vmem:[%s287 + $0x68] sm:$0xf] %vm2865, %v2859
        %2893 = vst.msk [vmem:[%s287 + $0x6c] sm:$0xf] %vm2865, %v2860
        %2894 = vst.msk [vmem:[%s287 + $0x70] sm:$0xf] %vm2865, %v2861
        %2895 = vst.msk [vmem:[%s287 + $0x74] sm:$0xf] %vm2865, %v2862
        %2896 = vst.msk [vmem:[%s287 + $0x78] sm:$0xf] %vm2865, %v2863
        %2897 = vst.msk [vmem:[%s287 + $0x7c] sm:$0xf] %vm2865, %v2864
      $region40: #{tpu_custom_call.1} parent=31 // pred_fallthru
        _
      %s2898 = smul.u32 32, %s20
      %p2899 = scmp.lt.s32.totalorder %s19, 3
      %s2900 = scalar_select %p2899, %s19, 3
      %p2901 = scmp.lt.s32.totalorder %s2898, 31
      %s2902 = scalar_select %p2901, %s2898, 31
      %s2903 = smul.addr %s2900, 32
      %s2904 = sadd.s32 %s2902, %s2903
      %s2905 = smul.addr %s2904, 4
      %s2906 = scalar_lea.vmem %s3, %s2905
      // Predicated region
      $region41: #{tpu_custom_call.1} parent=31 // pred_check
        %p2907 = pneg %p137
      $region42: #{tpu_custom_call.1} parent=31 // pred_check_branch
        %2909 = sbr.rel (%p2907) target = $region44
      $region43: #{tpu_custom_call.1} parent=31 // pred_region
        %s2910 = smul.u32 32, %s20
      $region44: #{tpu_custom_call.1} parent=31 // pred_fallthru
        _
    $region32: #{tpu_custom_call.1} parent=5 // pred_fallthru
      _
    %p2911 = scmp.le.s32.totalorder 2, %s9
    // Predicated region
    $region45: #{tpu_custom_call.1} parent=5 // pred_check
      %p2912 = pneg %p2911
    $region46: #{tpu_custom_call.1} parent=5 // pred_check_branch
      %2914 = sbr.rel (%p2912) target = $region48
    $region47: #{tpu_custom_call.1} parent=5 // pred_region
      %s2915 = ssub.s32 %s9, 2
      // Predicated region
      $region49: #{tpu_custom_call.1} parent=47 // pred_check
        %p2916 = pneg %p143
      $region50: #{tpu_custom_call.1} parent=47 // pred_check_branch
        %2918 = sbr.rel (%p2916) target = $region52
      $region51: #{tpu_custom_call.1} parent=47 // pred_region
        %s2919 = smul.u32 32, %s23
        %p2920 = scmp.lt.s32.totalorder %s22, 3
        %s2921 = scalar_select %p2920, %s22, 3
        %p2922 = scmp.lt.s32.totalorder %s2919, 31
        %s2923 = scalar_select %p2922, %s2919, 31
        %s2924 = smul.addr %s2921, 32
        %s2925 = sadd.s32 %s2923, %s2924
        %s2926 = smul.addr %s2925, 4
        %s2927 = scalar_lea.vmem %s3, %s2926
      $region52: #{tpu_custom_call.1} parent=47 // pred_fallthru
        _
    $region48: #{tpu_custom_call.1} parent=5 // pred_fallthru
      _
  $region6: #{tpu_custom_call.1} parent=0 // loop_footer
    %s13 = sadd.s32 1, %s9
  $region7: #{tpu_custom_call.1} parent=0 // loop_footer_branch
    %8 = sbr.rel target = $region3
  $region8: #{tpu_custom_call.1} parent=0 // loop_exit
    _

</llo_original>
